<compile_context>
chip_gen: v5e
topology: v5e:2x2
jax: 0.10.0
libtpu: 0.0.40
codegen_flags: <defaults>
</compile_context>

<pallas_src>
from contextlib import contextmanager
from functools import partial

import jax
import jax.numpy as jnp
from jax.experimental import pallas as pl
from jax.experimental.pallas import tpu as pltpu


# ----------------------------------------------------------------------------
# Generation-aware helpers
# ----------------------------------------------------------------------------
def _device_kind() -> str:
    try:
        return (jax.devices()[0].device_kind or "").lower()
    except Exception:
        return ""


def _tensorcores_per_chip_hint() -> int:
    # v7x packs 2 TensorCores per chip; keep the "parallel" grid a multiple of 2
    # there so neither core idles.  v5e/v6e have a single TC.
    return 2 if "7" in _device_kind() else 1


def _vmem_limit_bytes() -> int:
    kind = _device_kind()
    if "7" in kind:                      # v7x: 64 MiB physical per TC
        return 48 * 1024 * 1024
    if "v2" in kind or "v3" in kind:     # legacy parts: small VMEM
        return 16 * 1024 * 1024
    return 64 * 1024 * 1024              # v5e/v6e: 128 MiB physical


def _sublane_multiple(dtype) -> int:
    # 8 rows per vreg at 32-bit; sub-32-bit dtypes pack along sublanes.
    itemsize = jnp.dtype(dtype).itemsize
    return 8 * max(1, 4 // itemsize)     # f32 -> 8, bf16 -> 16, int8 -> 32


def _round_up(x: int, m: int) -> int:
    return ((x + m - 1) // m) * m


def _pick_batch_tile(B: int, dtype, block_m: int, n_cores: int) -> int:
    """Largest dtype-aligned batch tile <= block_m that keeps >= n_cores grid
    steps (when B allows) and preferably divides B exactly."""
    sub = _sublane_multiple(dtype)
    if B <= sub:
        return B
    tm = min(block_m, B)
    tm = max(sub, (tm // sub) * sub)
    if n_cores > 1:
        per_core = (B // n_cores // sub) * sub
        if per_core >= sub:
            tm = min(tm, per_core)
    # Prefer a tile that divides B exactly (avoids a masked partial last block).
    t = tm
    while t > sub and B % t != 0:
        t -= sub
    if B % t == 0:
        tm = t
    return tm


# ----------------------------------------------------------------------------
# Pallas kernel 1: fused forward of the wrapped module
#   out = relu(x @ W1 + b1) @ W2 + b2
# Operands stay in their native (bf16) dtype; accumulation is f32 on the MXU.
# ----------------------------------------------------------------------------
def _mlp_forward_kernel(x_ref, w1_ref, b1_ref, w2_ref, b2_ref, o_ref):
    # First matmul: bf16 x bf16 -> f32 accumulator.
    h = jnp.dot(x_ref[...], w1_ref[...], preferred_element_type=jnp.float32)
    h = jnp.maximum(h + b1_ref[...].astype(jnp.float32), 0.0)
    # Cast activation back to the operand dtype so the second matmul also runs
    # the full-rate MXU path.
    h = h.astype(x_ref.dtype)
    o = jnp.dot(h, w2_ref[...], preferred_element_type=jnp.float32)
    o = o + b2_ref[...].astype(jnp.float32)
    o_ref[...] = o.astype(o_ref.dtype)


def mlp_forward_pallas(x, w1, b1, w2, b2, *, block_m=512):
    """x: (B, D_in), w1: (D_in, H), b1: (1, H), w2: (H, D_out), b2: (1, D_out).

    Batch is tiled over a 1-D "parallel" grid (split across v7x's 2 TCs);
    weights and biases use index_map (0, 0) so they stay resident in VMEM and,
    when supported, are single-buffered (pl.Buffered(1)) since their block
    never changes.  Feature dims should be multiples of 256 for full MXU
    contraction on v6e/v7x (128-native on v5e).
    """
    B, D_in = x.shape
    H = w1.shape[1]
    D_out = w2.shape[1]

    n_cores = _tensorcores_per_chip_hint()
    tm = _pick_batch_tile(B, x.dtype, block_m, n_cores)
    grid = (pl.cdiv(B, tm),)
    vmem_limit = _vmem_limit_bytes()

    def build_call(single_buffer_weights):
        def const_spec(shape):
            if single_buffer_weights:
                # Constant index_map: no benefit from double-buffering; halves
                # the resident-weight VMEM footprint (matters on v7x's 64 MiB).
                return pl.BlockSpec(shape, lambda i: (0, 0),
                                    pipeline_mode=pl.Buffered(1))
            return pl.BlockSpec(shape, lambda i: (0, 0))

        return pl.pallas_call(
            _mlp_forward_kernel,
            out_shape=jax.ShapeDtypeStruct((B, D_out), x.dtype),
            grid=grid,
            in_specs=[
                pl.BlockSpec((tm, D_in), lambda i: (i, 0)),  # activations: tiled
                const_spec((D_in, H)),                       # W1: resident
                const_spec((1, H)),                          # b1: resident
                const_spec((H, D_out)),                      # W2: resident
                const_spec((1, D_out)),                      # b2: resident
            ],
            out_specs=pl.BlockSpec((tm, D_out), lambda i: (i, 0)),
            compiler_params=pltpu.CompilerParams(
                dimension_semantics=("parallel",),
                vmem_limit_bytes=vmem_limit,
            ),
        )

    try:
        return build_call(True)(x, w1, b1, w2, b2)
    except Exception:
        # pipeline_mode=pl.Buffered(1) unsupported on this jax/mosaic build:
        # fall back to default double-buffered resident weights.
        return build_call(False)(x, w1, b1, w2, b2)


# ----------------------------------------------------------------------------
# Pallas kernel 2: local part of reduce(): buffer.div_(world_size)
#   Grid-tiled, in-place (input_output_aliases), scale computed in f32.
# ----------------------------------------------------------------------------
def _grad_scale_kernel(g_ref, o_ref, *, inv_world_size):
    o_ref[...] = (g_ref[...].astype(jnp.float32) * inv_world_size).astype(o_ref.dtype)


def grad_scale_pallas(grad_flat, world_size, *, lanes=512, target_block_bytes=4 << 20):
    """grad_flat: (N,) flat gradient buffer -> grad_flat / world_size (in place).

    The buffer is expected to be allocated padded to a multiple of
    (sublane_multiple * lanes) elements (ShardedDataParallelJAX does this), so
    the whole array reshapes (free, contiguous) to a lane-dense (rows, 512)
    slab and is scaled by a grid of ~4 MiB blocks with input_output_aliases
    (matches buffer.div_ semantics).  An unpadded ragged tail, if ever present,
    falls back to a trivial JAX scale.
    """
    n = grad_flat.shape[0]
    inv_ws = 1.0 / float(world_size)
    sub = _sublane_multiple(grad_flat.dtype)
    itemsize = jnp.dtype(grad_flat.dtype).itemsize
    chunk = lanes * sub
    n_main = (n // chunk) * chunk

    parts = []
    if n_main > 0:
        rows = n_main // lanes
        g2d = (grad_flat if n_main == n else grad_flat[:n_main]).reshape(rows, lanes)
        row_bytes = lanes * itemsize
        br = (target_block_bytes // row_bytes // sub) * sub
        br = max(sub, min(br, rows))
        grid = (pl.cdiv(rows, br),)
        scaled = pl.pallas_call(
            partial(_grad_scale_kernel, inv_world_size=inv_ws),
            out_shape=jax.ShapeDtypeStruct((rows, lanes), grad_flat.dtype),
            grid=grid,
            in_specs=[pl.BlockSpec((br, lanes), lambda i: (i, 0))],
            out_specs=pl.BlockSpec((br, lanes), lambda i: (i, 0)),
            input_output_aliases={0: 0},  # in-place, matches buffer.div_()
            compiler_params=pltpu.CompilerParams(
                dimension_semantics=("parallel",),
                vmem_limit_bytes=_vmem_limit_bytes(),
            ),
        )(g2d)
        parts.append(scaled.reshape(n_main))
    if n_main < n:
        # TODO(synk): ragged tail handled in plain JAX; the wrapper pads the
        # grad buffer so this branch never runs (keeps the kernel pad-free and
        # truly in-place).  Long-term the scale is fused into the collective.
        parts.append(grad_flat[n_main:] * jnp.asarray(inv_ws, grad_flat.dtype))
    return parts[0] if len(parts) == 1 else jnp.concatenate(parts)


# ----------------------------------------------------------------------------
# Minimal JAX-side ShardedDataParallel replicating the wrapper semantics
# ----------------------------------------------------------------------------
class ShardedDataParallelJAX:
    GRAD_LANES = 512  # lane width of the flat-grad view inside the scale kernel

    def __init__(self, params, world_size, buffer_size=2 ** 28):
        self.params = params  # dict of arrays for the wrapped MLP
        self.world_size = world_size
        total_numel = sum(int(p.size) for p in params.values())
        self.buffer_size = min(buffer_size, total_numel)
        # Pad the flat grad/reduce buffer to a multiple of (8 sublanes x 512
        # lanes) worth of elements so grad_scale_pallas is a single pad-free,
        # in-place pass (no slice / concatenate round trip).
        grad_dtype = jnp.float32
        pad_to = _sublane_multiple(grad_dtype) * self.GRAD_LANES
        self.grad_buffer_numel = _round_up(self.buffer_size, pad_to)
        self.training = True
        self.need_reduction = False
        self.accumulate_grads = False

    def train(self, mode=True):
        self.training = mode
        if not mode:
            assert not self.need_reduction, "try to enter eval with grads unreduced"
        return self

    @contextmanager
    def no_sync(self):
        old = self.accumulate_grads
        self.accumulate_grads = True
        yield
        self.accumulate_grads = old

    def forward(self, x):
        if self.training:
            if self.need_reduction:
                raise RuntimeError("OssDdp requires explicit reduction, must call reduce")
            if not self.accumulate_grads:
                self.need_reduction = True
        p = self.params
        return mlp_forward_pallas(x, p["w1"], p["b1"], p["w2"], p["b2"])

    def reduce(self, grads_flat):
        """Local portion of reduce(): scale the flat grad buffer by 1/world_size."""
        assert self.training, "Cannot call reduce in eval"
        if not self.need_reduction or self.accumulate_grads:
            return grads_flat
        self.need_reduction = False
        # TODO(synk): cross-device dist.reduce omitted (single-device emulation);
        #             on multi-chip this becomes make_async_remote_copy + semaphores
        #             with the 1/world_size scale fused into each staged chunk.
        return grad_scale_pallas(grads_flat, self.world_size,
                                 lanes=self.GRAD_LANES)


# ----------------------------------------------------------------------------
# Main
# ----------------------------------------------------------------------------
if __name__ == "__main__":
    key = jax.random.PRNGKey(0)
    k_x, k_w1, k_w2, k_b1, k_b2, k_g = jax.random.split(key, 6)

    # Wrapped module: Linear(256 -> 256) + ReLU + Linear(256 -> 256), bf16.
    # 256-aligned feature dims fill the 256-wide MXU contraction on v6e/v7x.
    B, D_in, H, D_out = 256, 256, 256, 256
    params = {
        "w1": (jax.random.normal(k_w1, (D_in, H), jnp.float32) * 0.1).astype(jnp.bfloat16),
        "b1": (jax.random.normal(k_b1, (1, H), jnp.float32) * 0.01).astype(jnp.bfloat16),
        "w2": (jax.random.normal(k_w2, (H, D_out), jnp.float32) * 0.1).astype(jnp.bfloat16),
        "b2": (jax.random.normal(k_b2, (1, D_out), jnp.float32) * 0.01).astype(jnp.bfloat16),
    }
    x = jax.random.normal(k_x, (B, D_in), jnp.float32).astype(jnp.bfloat16)

    world_size = 4
    sdp = ShardedDataParallelJAX(params, world_size=world_size)

    # Forward pass through the Pallas kernel
    out = sdp.forward(x)
    out = jax.block_until_ready(out)

    # Reference check of the forward compute (f32 reference of the bf16 params)
    xf = x.astype(jnp.float32)
    w1f, b1f = params["w1"].astype(jnp.float32), params["b1"].astype(jnp.float32)
    w2f, b2f = params["w2"].astype(jnp.float32), params["b2"].astype(jnp.float32)
    ref = jnp.maximum(xf @ w1f + b1f, 0.0) @ w2f + b2f
    assert jnp.allclose(out.astype(jnp.float32), ref, atol=2e-1, rtol=5e-2), "forward mismatch"

    # Emulate reduce(): flat (padded) grad buffer scaled by 1/world_size in a
    # single pad-free, in-place Pallas pass.
    grads_flat = jax.random.normal(k_g, (sdp.grad_buffer_numel,), jnp.float32)
    reduced = sdp.reduce(grads_flat)
    reduced = jax.block_until_ready(reduced)
    assert reduced.shape == grads_flat.shape
    assert jnp.allclose(reduced, grads_flat / world_size, atol=1e-6), "reduce mismatch"

    # no_sync context: forward should not flip need_reduction
    with sdp.no_sync():
        _ = jax.block_until_ready(sdp.forward(x))
    assert not sdp.need_reduction

    print("KERNEL_OK")
</pallas_src>

<mosaic_0001>
module attributes {stable_mosaic.version = 11 : i64} {
  func.func @_mlp_forward_kernel(%arg0: i32, %arg1: memref<256x256xbf16, #tpu.memory_space<vmem>>, %arg2: memref<256x256xbf16, #tpu.memory_space<vmem>>, %arg3: memref<1x256xbf16, #tpu.memory_space<vmem>>, %arg4: memref<256x256xbf16, #tpu.memory_space<vmem>>, %arg5: memref<1x256xbf16, #tpu.memory_space<vmem>>, %arg6: memref<256x256xbf16, #tpu.memory_space<vmem>>) attributes {dimension_semantics = [#tpu.dimension_semantics<parallel>], iteration_bounds = array<i64: 1>, scalar_prefetch = 0 : i64, scratch_operands = 0 : i64, tpu.core_type = #tpu.core_type<tc>, window_params = [{transform_indices = @transform_0, window_bounds = array<i64: 256, 256>}, {pipeline_mode = #tpu.pipeline_mode<synchronous>, transform_indices = @transform_1, window_bounds = array<i64: 256, 256>}, {pipeline_mode = #tpu.pipeline_mode<synchronous>, transform_indices = @transform_2, window_bounds = array<i64: 1, 256>}, {pipeline_mode = #tpu.pipeline_mode<synchronous>, transform_indices = @transform_3, window_bounds = array<i64: 256, 256>}, {pipeline_mode = #tpu.pipeline_mode<synchronous>, transform_indices = @transform_4, window_bounds = array<i64: 1, 256>}, {transform_indices = @transform_5, window_bounds = array<i64: 256, 256>}]} {
    %c0 = arith.constant 0 : index
    %c0_0 = arith.constant 0 : index
    %0 = vector.load %arg1[%c0, %c0_0] : memref<256x256xbf16, #tpu.memory_space<vmem>>, vector<256x256xbf16>
    %c0_1 = arith.constant 0 : index
    %c0_2 = arith.constant 0 : index
    %1 = vector.load %arg2[%c0_1, %c0_2] : memref<256x256xbf16, #tpu.memory_space<vmem>>, vector<256x256xbf16>
    %cst = arith.constant dense<0.000000e+00> : vector<256x256xf32>
    %2 = tpu.matmul %0, %1, %cst {dimension_numbers = #tpu.dot_dimension_numbers<[1], [0], [0], [1], [0, 0, 1, 1], [], []>} : vector<256x256xbf16>, vector<256x256xbf16>, vector<256x256xf32> -> vector<256x256xf32>
    %c0_3 = arith.constant 0 : index
    %c0_4 = arith.constant 0 : index
    %3 = vector.load %arg3[%c0_3, %c0_4] : memref<1x256xbf16, #tpu.memory_space<vmem>>, vector<1x256xbf16>
    %4 = arith.extf %3 : vector<1x256xbf16> to vector<1x256xf32>
    %5 = vector.broadcast %4 : vector<1x256xf32> to vector<256x256xf32>
    %6 = arith.addf %2, %5 : vector<256x256xf32>
    %cst_5 = arith.constant 0.000000e+00 : f32
    %7 = vector.broadcast %cst_5 : f32 to vector<256x256xf32>
    %8 = arith.maximumf %6, %7 : vector<256x256xf32>
    %9 = arith.truncf %8 : vector<256x256xf32> to vector<256x256xbf16>
    %c0_6 = arith.constant 0 : index
    %c0_7 = arith.constant 0 : index
    %10 = vector.load %arg4[%c0_6, %c0_7] : memref<256x256xbf16, #tpu.memory_space<vmem>>, vector<256x256xbf16>
    %cst_8 = arith.constant dense<0.000000e+00> : vector<256x256xf32>
    %11 = tpu.matmul %9, %10, %cst_8 {dimension_numbers = #tpu.dot_dimension_numbers<[1], [0], [0], [1], [0, 0, 1, 1], [], []>} : vector<256x256xbf16>, vector<256x256xbf16>, vector<256x256xf32> -> vector<256x256xf32>
    %c0_9 = arith.constant 0 : index
    %c0_10 = arith.constant 0 : index
    %12 = vector.load %arg5[%c0_9, %c0_10] : memref<1x256xbf16, #tpu.memory_space<vmem>>, vector<1x256xbf16>
    %13 = arith.extf %12 : vector<1x256xbf16> to vector<1x256xf32>
    %14 = vector.broadcast %13 : vector<1x256xf32> to vector<256x256xf32>
    %15 = arith.addf %11, %14 : vector<256x256xf32>
    %16 = arith.truncf %15 : vector<256x256xf32> to vector<256x256xbf16>
    %c0_11 = arith.constant 0 : index
    %c0_12 = arith.constant 0 : index
    %17 = vector.load %arg6[%c0_11, %c0_12] : memref<256x256xbf16, #tpu.memory_space<vmem>>, vector<256x256xbf16>
    tpu.vector_store %arg6[%c0_11, %c0_12], %16 {strides = array<i32>} : memref<256x256xbf16, #tpu.memory_space<vmem>>, vector<256x256xbf16>,
    return
  }
  func.func @transform_0(%arg0: i32) -> (i32, i32) {
    %c0_i32 = arith.constant 0 : i32
    %c0_i32_0 = arith.constant 0 : i32
    return %arg0, %c0_i32 : i32, i32
  }
  func.func @transform_1(%arg0: i32) -> (i32, i32) {
    %c0_i32 = arith.constant 0 : i32
    %c0_i32_0 = arith.constant 0 : i32
    %c0_i32_1 = arith.constant 0 : i32
    return %c0_i32, %c0_i32_0 : i32, i32
  }
  func.func @transform_2(%arg0: i32) -> (i32, i32) {
    %c0_i32 = arith.constant 0 : i32
    %c0_i32_0 = arith.constant 0 : i32
    %c0_i32_1 = arith.constant 0 : i32
    return %c0_i32, %c0_i32_0 : i32, i32
  }
  func.func @transform_3(%arg0: i32) -> (i32, i32) {
    %c0_i32 = arith.constant 0 : i32
    %c0_i32_0 = arith.constant 0 : i32
    %c0_i32_1 = arith.constant 0 : i32
    return %c0_i32, %c0_i32_0 : i32, i32
  }
  func.func @transform_4(%arg0: i32) -> (i32, i32) {
    %c0_i32 = arith.constant 0 : i32
    %c0_i32_0 = arith.constant 0 : i32
    %c0_i32_1 = arith.constant 0 : i32
    return %c0_i32, %c0_i32_0 : i32, i32
  }
  func.func @transform_5(%arg0: i32) -> (i32, i32) {
    %c0_i32 = arith.constant 0 : i32
    %c0_i32_0 = arith.constant 0 : i32
    return %arg0, %c0_i32 : i32, i32
  }
}

module attributes {stable_mosaic.version = 11 : i64} {
  func.func @_mlp_forward_kernel(%arg0: i32, %arg1: memref<256x256xbf16, #tpu.memory_space<vmem>>, %arg2: memref<256x256xbf16, #tpu.memory_space<vmem>>, %arg3: memref<1x256xbf16, #tpu.memory_space<vmem>>, %arg4: memref<256x256xbf16, #tpu.memory_space<vmem>>, %arg5: memref<1x256xbf16, #tpu.memory_space<vmem>>, %arg6: memref<256x256xbf16, #tpu.memory_space<vmem>>) attributes {dimension_semantics = [#tpu.dimension_semantics<parallel>], iteration_bounds = array<i64: 1>, scalar_prefetch = 0 : i64, scratch_operands = 0 : i64, tpu.core_type = #tpu.core_type<tc>, window_params = [{transform_indices = @transform_0, window_bounds = array<i64: 256, 256>}, {pipeline_mode = #tpu.pipeline_mode<synchronous>, transform_indices = @transform_1, window_bounds = array<i64: 256, 256>}, {pipeline_mode = #tpu.pipeline_mode<synchronous>, transform_indices = @transform_2, window_bounds = array<i64: 1, 256>}, {pipeline_mode = #tpu.pipeline_mode<synchronous>, transform_indices = @transform_3, window_bounds = array<i64: 256, 256>}, {pipeline_mode = #tpu.pipeline_mode<synchronous>, transform_indices = @transform_4, window_bounds = array<i64: 1, 256>}, {transform_indices = @transform_5, window_bounds = array<i64: 256, 256>}]} {
    %c0 = arith.constant 0 : index
    %c0_0 = arith.constant 0 : index
    %0 = vector.load %arg1[%c0, %c0_0] : memref<256x256xbf16, #tpu.memory_space<vmem>>, vector<256x256xbf16>
    %c0_1 = arith.constant 0 : index
    %c0_2 = arith.constant 0 : index
    %1 = vector.load %arg2[%c0_1, %c0_2] : memref<256x256xbf16, #tpu.memory_space<vmem>>, vector<256x256xbf16>
    %cst = arith.constant dense<0.000000e+00> : vector<256x256xf32>
    %2 = tpu.matmul %0, %1, %cst {dimension_numbers = #tpu.dot_dimension_numbers<[1], [0], [0], [1], [0, 0, 1, 1], [], []>} : vector<256x256xbf16>, vector<256x256xbf16>, vector<256x256xf32> -> vector<256x256xf32>
    %c0_3 = arith.constant 0 : index
    %c0_4 = arith.constant 0 : index
    %3 = vector.load %arg3[%c0_3, %c0_4] : memref<1x256xbf16, #tpu.memory_space<vmem>>, vector<1x256xbf16>
    %4 = arith.extf %3 : vector<1x256xbf16> to vector<1x256xf32>
    %5 = vector.broadcast %4 : vector<1x256xf32> to vector<256x256xf32>
    %6 = arith.addf %2, %5 : vector<256x256xf32>
    %cst_5 = arith.constant 0.000000e+00 : f32
    %7 = vector.broadcast %cst_5 : f32 to vector<256x256xf32>
    %8 = arith.maximumf %6, %7 : vector<256x256xf32>
    %9 = arith.truncf %8 : vector<256x256xf32> to vector<256x256xbf16>
    %c0_6 = arith.constant 0 : index
    %c0_7 = arith.constant 0 : index
    %10 = vector.load %arg4[%c0_6, %c0_7] : memref<256x256xbf16, #tpu.memory_space<vmem>>, vector<256x256xbf16>
    %cst_8 = arith.constant dense<0.000000e+00> : vector<256x256xf32>
    %11 = tpu.matmul %9, %10, %cst_8 {dimension_numbers = #tpu.dot_dimension_numbers<[1], [0], [0], [1], [0, 0, 1, 1], [], []>} : vector<256x256xbf16>, vector<256x256xbf16>, vector<256x256xf32> -> vector<256x256xf32>
    %c0_9 = arith.constant 0 : index
    %c0_10 = arith.constant 0 : index
    %12 = vector.load %arg5[%c0_9, %c0_10] : memref<1x256xbf16, #tpu.memory_space<vmem>>, vector<1x256xbf16>
    %13 = arith.extf %12 : vector<1x256xbf16> to vector<1x256xf32>
    %14 = vector.broadcast %13 : vector<1x256xf32> to vector<256x256xf32>
    %15 = arith.addf %11, %14 : vector<256x256xf32>
    %16 = arith.truncf %15 : vector<256x256xf32> to vector<256x256xbf16>
    %c0_11 = arith.constant 0 : index
    %c0_12 = arith.constant 0 : index
    %17 = vector.load %arg6[%c0_11, %c0_12] : memref<256x256xbf16, #tpu.memory_space<vmem>>, vector<256x256xbf16>
    tpu.vector_store %arg6[%c0_11, %c0_12], %16 {strides = array<i32>} : memref<256x256xbf16, #tpu.memory_space<vmem>>, vector<256x256xbf16>,
    return
  }
  func.func @transform_0(%arg0: i32) -> (i32, i32) {
    %c0_i32 = arith.constant 0 : i32
    %c0_i32_0 = arith.constant 0 : i32
    return %arg0, %c0_i32 : i32, i32
  }
  func.func @transform_1(%arg0: i32) -> (i32, i32) {
    %c0_i32 = arith.constant 0 : i32
    %c0_i32_0 = arith.constant 0 : i32
    %c0_i32_1 = arith.constant 0 : i32
    return %c0_i32, %c0_i32_0 : i32, i32
  }
  func.func @transform_2(%arg0: i32) -> (i32, i32) {
    %c0_i32 = arith.constant 0 : i32
    %c0_i32_0 = arith.constant 0 : i32
    %c0_i32_1 = arith.constant 0 : i32
    return %c0_i32, %c0_i32_0 : i32, i32
  }
  func.func @transform_3(%arg0: i32) -> (i32, i32) {
    %c0_i32 = arith.constant 0 : i32
    %c0_i32_0 = arith.constant 0 : i32
    %c0_i32_1 = arith.constant 0 : i32
    return %c0_i32, %c0_i32_0 : i32, i32
  }
  func.func @transform_4(%arg0: i32) -> (i32, i32) {
    %c0_i32 = arith.constant 0 : i32
    %c0_i32_0 = arith.constant 0 : i32
    %c0_i32_1 = arith.constant 0 : i32
    return %c0_i32, %c0_i32_0 : i32, i32
  }
  func.func @transform_5(%arg0: i32) -> (i32, i32) {
    %c0_i32 = arith.constant 0 : i32
    %c0_i32_0 = arith.constant 0 : i32
    return %arg0, %c0_i32 : i32, i32
  }
}

</mosaic_0001>

<llo_original>
// kernel: tpu_custom_call.1
$region0: #{tpu_custom_call.1}
  #allocation0 [shape = 'u32[]', space=smem, size = 0x4, offset = 0x4, fixed_abs, tag = 'smem constant byte address 0x4 - core index']
  #allocation1 [shape = 'u32[72,128]{1,0:T(1,128)}', space=vmem, size = 0x9000, scoped, tag = 'internal scratch']
  %s0 = inlined_call_operand.hbm [shape: bf16[256,256], index: 0, kind: input, shape index: {}]
  %s1 = inlined_call_operand.hbm [shape: bf16[256,256], index: 1, kind: input, shape index: {}]
  %s2 = inlined_call_operand.hbm [shape: bf16[1,256], index: 2, kind: input, shape index: {}]
  %s3 = inlined_call_operand.hbm [shape: bf16[256,256], index: 3, kind: input, shape index: {}]
  %s4 = inlined_call_operand.vmem [shape: bf16[1,256], index: 4, kind: input, shape index: {}]
  %s5 = inlined_call_operand.hbm [shape: bf16[256,256], index: 5, kind: output, shape index: {}]
  %s6 = sld [smem:[#allocation0]]
  $region46: #{tpu_custom_call.1} parent=0
    _
  %s8 = ssub.s32 1, %s6
  %s9 = scalar_select 0, %s8, %s6
  $region1: #{tpu_custom_call.1} parent=0
    #allocation2 [shape = 'u8[131072]{0}', space=vmem, size = 0x20000, scoped, tag = 'input window, operand 0, single buffered']
    #allocation3 [shape = 's32[1]{0}', space=sflag, size = 0x4, scoped, tag = 'scoped memory for tpu_custom_call.1']
    #allocation4 [shape = 's32[1]{0}', space=sflag, size = 0x4, scoped, tag = 'scoped memory for tpu_custom_call.1']
    #allocation5 [shape = 'u8[131072]{0}', space=vmem, size = 0x20000, scoped, tag = 'input window, operand 1, single buffered']
    #allocation6 [shape = 's32[1]{0}', space=sflag, size = 0x4, scoped, tag = 'scoped memory for tpu_custom_call.1']
    #allocation7 [shape = 'u8[1024]{0}', space=vmem, size = 0x400, scoped, tag = 'input window, operand 2, single buffered']
    #allocation8 [shape = 'u8[131072]{0}', space=vmem, size = 0x20000, scoped, tag = 'input window, operand 3, single buffered']
    #allocation9 [shape = 's32[1]{0}', space=sflag, size = 0x4, scoped, tag = 'scoped memory for tpu_custom_call.1']
    #allocation10 [shape = 'u8[131072]{0}', space=vmem, size = 0x20000, scoped, tag = 'output window, operand 0, single buffered']
    %10 = vsyncpa [#allocation3], 0
    %11 = vsyncpa [#allocation6], 0
    %12 = vsyncpa [#allocation9], 0
    %13 = vsyncpa [#allocation4], 0
    // Predicated region
    $region2: #{tpu_custom_call.1} parent=1 // pred_check
      _
    $region3: #{tpu_custom_call.1} parent=1 // pred_check_branch
      %15 = sbr.rel (0) target = $region5
    $region4: #{tpu_custom_call.1} parent=1 // pred_region
      %17 = vsyncadd [#allocation3], 0
      %s18 = sshll.u32 %s0, 4
      %s19 = int_to_ptr.hbm [resolvable:$true] %s18
      %s20 = sshll.u32 [#allocation2], 4
      %s21 = int_to_ptr.vmem [resolvable:$true] %s20
      %26 = dma.hbm_to_vmem [thread:$0]  %s19, 4096, %s21, [#allocation3], 128, 128, 8
    $region5: #{tpu_custom_call.1} parent=1 // pred_fallthru
      _
    // Predicated region
    $region6: #{tpu_custom_call.1} parent=1 // pred_check
      _
    $region7: #{tpu_custom_call.1} parent=1 // pred_check_branch
      %28 = sbr.rel (0) target = $region9
    $region8: #{tpu_custom_call.1} parent=1 // pred_region
      %30 = vsyncadd [#allocation6], 0
      %s31 = sshll.u32 %s1, 4
      %s32 = int_to_ptr.hbm [resolvable:$true] %s31
      %s33 = sshll.u32 [#allocation5], 4
      %s34 = int_to_ptr.vmem [resolvable:$true] %s33
      %39 = dma.hbm_to_vmem [thread:$0]  %s32, 4096, %s34, [#allocation6], 128, 128, 8
    $region9: #{tpu_custom_call.1} parent=1 // pred_fallthru
      _
    // Predicated region
    $region10: #{tpu_custom_call.1} parent=1 // pred_check
      _
    $region11: #{tpu_custom_call.1} parent=1 // pred_check_branch
      %41 = sbr.rel (0) target = $region13
    $region12: #{tpu_custom_call.1} parent=1 // pred_region
      %43 = vsyncadd [#allocation6], 0
      %s45 = sshll.u32 %s2, 4
      %s46 = int_to_ptr.hbm [resolvable:$true] %s45
      %s47 = sshll.u32 [#allocation7], 4
      %s48 = int_to_ptr.vmem [resolvable:$true] %s47
      %50 = dma.hbm_to_vmem [thread:$0]  %s46, 32, %s48, [#allocation6]
    $region13: #{tpu_custom_call.1} parent=1 // pred_fallthru
      _
    // Predicated region
    $region14: #{tpu_custom_call.1} parent=1 // pred_check
      _
    $region15: #{tpu_custom_call.1} parent=1 // pred_check_branch
      %52 = sbr.rel (0) target = $region17
    $region16: #{tpu_custom_call.1} parent=1 // pred_region
      %54 = vsyncadd [#allocation9], 0
      %s55 = sshll.u32 %s3, 4
      %s56 = int_to_ptr.hbm [resolvable:$true] %s55
      %s57 = sshll.u32 [#allocation8], 4
      %s58 = int_to_ptr.vmem [resolvable:$true] %s57
      %63 = dma.hbm_to_vmem [thread:$0]  %s56, 4096, %s58, [#allocation9], 128, 128, 8
    $region17: #{tpu_custom_call.1} parent=1 // pred_fallthru
      _
    // Predicated region
    $region18: #{tpu_custom_call.1} parent=1 // pred_check
      _
    $region19: #{tpu_custom_call.1} parent=1 // pred_check_branch
      %65 = sbr.rel (0) target = $region21
    $region20: #{tpu_custom_call.1} parent=1 // pred_region
      _
    $region21: #{tpu_custom_call.1} parent=1 // pred_fallthru
      _
    // Predicated region
    $region22: #{tpu_custom_call.1} parent=1 // pred_check
      _
    $region23: #{tpu_custom_call.1} parent=1 // pred_check_branch
      %67 = sbr.rel (0) target = $region25
    $region24: #{tpu_custom_call.1} parent=1 // pred_region
      %69 = dma.done [#allocation3], 4096
    $region25: #{tpu_custom_call.1} parent=1 // pred_fallthru
      _
    // Predicated region
    $region26: #{tpu_custom_call.1} parent=1 // pred_check
      _
    $region27: #{tpu_custom_call.1} parent=1 // pred_check_branch
      %71 = sbr.rel (0) target = $region29
    $region28: #{tpu_custom_call.1} parent=1 // pred_region
      %73 = dma.done [#allocation6], 4096
    $region29: #{tpu_custom_call.1} parent=1 // pred_fallthru
      _
    // Predicated region
    $region30: #{tpu_custom_call.1} parent=1 // pred_check
      _
    $region31: #{tpu_custom_call.1} parent=1 // pred_check_branch
      %75 = sbr.rel (0) target = $region33
    $region32: #{tpu_custom_call.1} parent=1 // pred_region
      %77 = dma.done [#allocation6], 32
    $region33: #{tpu_custom_call.1} parent=1 // pred_fallthru
      _
    // Predicated region
    $region34: #{tpu_custom_call.1} parent=1 // pred_check
      _
    $region35: #{tpu_custom_call.1} parent=1 // pred_check_branch
      %79 = sbr.rel (0) target = $region37
    $region36: #{tpu_custom_call.1} parent=1 // pred_region
      %81 = dma.done [#allocation9], 4096
    $region37: #{tpu_custom_call.1} parent=1 // pred_fallthru
      _
    %v82 = vld [vmem:[#allocation2] sm:$0xff]
    %v83 = vld [vmem:[#allocation2 + $0x8] sm:$0xff]
    %v84 = vld [vmem:[#allocation2 + $0x10] sm:$0xff]
    %v85 = vld [vmem:[#allocation2 + $0x18] sm:$0xff]
    %v86 = vld [vmem:[#allocation2 + $0x20] sm:$0xff]
    %v87 = vld [vmem:[#allocation2 + $0x28] sm:$0xff]
    %v88 = vld [vmem:[#allocation2 + $0x30] sm:$0xff]
    %v89 = vld [vmem:[#allocation2 + $0x38] sm:$0xff]
    %v90 = vld [vmem:[#allocation2 + $0x40] sm:$0xff]
    %v91 = vld [vmem:[#allocation2 + $0x48] sm:$0xff]
    %v92 = vld [vmem:[#allocation2 + $0x50] sm:$0xff]
    %v93 = vld [vmem:[#allocation2 + $0x58] sm:$0xff]
    %v94 = vld [vmem:[#allocation2 + $0x60] sm:$0xff]
    %v95 = vld [vmem:[#allocation2 + $0x68] sm:$0xff]
    %v96 = vld [vmem:[#allocation2 + $0x70] sm:$0xff]
    %v97 = vld [vmem:[#allocation2 + $0x78] sm:$0xff]
    %v98 = vld [vmem:[#allocation2 + $0x80] sm:$0xff]
    %v99 = vld [vmem:[#allocation2 + $0x88] sm:$0xff]
    %v100 = vld [vmem:[#allocation2 + $0x90] sm:$0xff]
    %v101 = vld [vmem:[#allocation2 + $0x98] sm:$0xff]
    %v102 = vld [vmem:[#allocation2 + $0xa0] sm:$0xff]
    %v103 = vld [vmem:[#allocation2 + $0xa8] sm:$0xff]
    %v104 = vld [vmem:[#allocation2 + $0xb0] sm:$0xff]
    %v105 = vld [vmem:[#allocation2 + $0xb8] sm:$0xff]
    %v106 = vld [vmem:[#allocation2 + $0xc0] sm:$0xff]
    %v107 = vld [vmem:[#allocation2 + $0xc8] sm:$0xff]
    %v108 = vld [vmem:[#allocation2 + $0xd0] sm:$0xff]
    %v109 = vld [vmem:[#allocation2 + $0xd8] sm:$0xff]
    %v110 = vld [vmem:[#allocation2 + $0xe0] sm:$0xff]
    %v111 = vld [vmem:[#allocation2 + $0xe8] sm:$0xff]
    %v112 = vld [vmem:[#allocation2 + $0xf0] sm:$0xff]
    %v113 = vld [vmem:[#allocation2 + $0xf8] sm:$0xff]
    %v114 = vld [vmem:[#allocation5] sm:$0xff]
    %v115 = vld [vmem:[#allocation5 + $0x8] sm:$0xff]
    %v116 = vld [vmem:[#allocation5 + $0x10] sm:$0xff]
    %v117 = vld [vmem:[#allocation5 + $0x18] sm:$0xff]
    %v118 = vld [vmem:[#allocation5 + $0x20] sm:$0xff]
    %v119 = vld [vmem:[#allocation5 + $0x28] sm:$0xff]
    %v120 = vld [vmem:[#allocation5 + $0x30] sm:$0xff]
    %v121 = vld [vmem:[#allocation5 + $0x38] sm:$0xff]
    %v122 = vld [vmem:[#allocation5 + $0x40] sm:$0xff]
    %v123 = vld [vmem:[#allocation5 + $0x48] sm:$0xff]
    %v124 = vld [vmem:[#allocation5 + $0x50] sm:$0xff]
    %v125 = vld [vmem:[#allocation5 + $0x58] sm:$0xff]
    %v126 = vld [vmem:[#allocation5 + $0x60] sm:$0xff]
    %v127 = vld [vmem:[#allocation5 + $0x68] sm:$0xff]
    %v128 = vld [vmem:[#allocation5 + $0x70] sm:$0xff]
    %v129 = vld [vmem:[#allocation5 + $0x78] sm:$0xff]
    %v130 = vld [vmem:[#allocation5 + $0x80] sm:$0xff]
    %v131 = vld [vmem:[#allocation5 + $0x88] sm:$0xff]
    %v132 = vld [vmem:[#allocation5 + $0x90] sm:$0xff]
    %v133 = vld [vmem:[#allocation5 + $0x98] sm:$0xff]
    %v134 = vld [vmem:[#allocation5 + $0xa0] sm:$0xff]
    %v135 = vld [vmem:[#allocation5 + $0xa8] sm:$0xff]
    %v136 = vld [vmem:[#allocation5 + $0xb0] sm:$0xff]
    %v137 = vld [vmem:[#allocation5 + $0xb8] sm:$0xff]
    %v138 = vld [vmem:[#allocation5 + $0xc0] sm:$0xff]
    %v139 = vld [vmem:[#allocation5 + $0xc8] sm:$0xff]
    %v140 = vld [vmem:[#allocation5 + $0xd0] sm:$0xff]
    %v141 = vld [vmem:[#allocation5 + $0xd8] sm:$0xff]
    %v142 = vld [vmem:[#allocation5 + $0xe0] sm:$0xff]
    %v143 = vld [vmem:[#allocation5 + $0xe8] sm:$0xff]
    %v144 = vld [vmem:[#allocation5 + $0xf0] sm:$0xff]
    %v145 = vld [vmem:[#allocation5 + $0xf8] sm:$0xff]
    %v146 = vld [vmem:[#allocation7] sm:$0x3]
    %v147 = vunpack.c.l.bf16 %v146
    %v149 = vperm.slane %v147, 0
    %v150 = vperm.slane %v147, 2
    %v153 = vperm.slane %v149, 0
    %v154 = vperm.slane %v150, 0
    %v187 = vunpack.c.l.b16 %v82
    %v188 = vunpack.c.h.b16 %v82
    %v189 = vunpack.c.l.b16 %v83
    %v190 = vunpack.c.h.b16 %v83
    %v191 = vunpack.c.l.b16 %v84
    %v192 = vunpack.c.h.b16 %v84
    %v193 = vunpack.c.l.b16 %v85
    %v194 = vunpack.c.h.b16 %v85
    %v195 = vunpack.c.l.b16 %v86
    %v196 = vunpack.c.h.b16 %v86
    %v197 = vunpack.c.l.b16 %v87
    %v198 = vunpack.c.h.b16 %v87
    %v199 = vunpack.c.l.b16 %v88
    %v200 = vunpack.c.h.b16 %v88
    %v201 = vunpack.c.l.b16 %v89
    %v202 = vunpack.c.h.b16 %v89
    %v203 = vunpack.c.l.b16 %v90
    %v204 = vunpack.c.h.b16 %v90
    %v205 = vunpack.c.l.b16 %v91
    %v206 = vunpack.c.h.b16 %v91
    %v207 = vunpack.c.l.b16 %v92
    %v208 = vunpack.c.h.b16 %v92
    %v209 = vunpack.c.l.b16 %v93
    %v210 = vunpack.c.h.b16 %v93
    %v211 = vunpack.c.l.b16 %v94
    %v212 = vunpack.c.h.b16 %v94
    %v213 = vunpack.c.l.b16 %v95
    %v214 = vunpack.c.h.b16 %v95
    %v215 = vunpack.c.l.b16 %v96
    %v216 = vunpack.c.h.b16 %v96
    %v217 = vunpack.c.l.b16 %v97
    %v218 = vunpack.c.h.b16 %v97
    %v219 = vunpack.c.l.b16 %v98
    %v220 = vunpack.c.h.b16 %v98
    %v221 = vunpack.c.l.b16 %v99
    %v222 = vunpack.c.h.b16 %v99
    %v223 = vunpack.c.l.b16 %v100
    %v224 = vunpack.c.h.b16 %v100
    %v225 = vunpack.c.l.b16 %v101
    %v226 = vunpack.c.h.b16 %v101
    %v227 = vunpack.c.l.b16 %v102
    %v228 = vunpack.c.h.b16 %v102
    %v229 = vunpack.c.l.b16 %v103
    %v230 = vunpack.c.h.b16 %v103
    %v231 = vunpack.c.l.b16 %v104
    %v232 = vunpack.c.h.b16 %v104
    %v233 = vunpack.c.l.b16 %v105
    %v234 = vunpack.c.h.b16 %v105
    %v235 = vunpack.c.l.b16 %v106
    %v236 = vunpack.c.h.b16 %v106
    %v237 = vunpack.c.l.b16 %v107
    %v238 = vunpack.c.h.b16 %v107
    %v239 = vunpack.c.l.b16 %v108
    %v240 = vunpack.c.h.b16 %v108
    %v241 = vunpack.c.l.b16 %v109
    %v242 = vunpack.c.h.b16 %v109
    %v243 = vunpack.c.l.b16 %v110
    %v244 = vunpack.c.h.b16 %v110
    %v245 = vunpack.c.l.b16 %v111
    %v246 = vunpack.c.h.b16 %v111
    %v247 = vunpack.c.l.b16 %v112
    %v248 = vunpack.c.h.b16 %v112
    %v249 = vunpack.c.l.b16 %v113
    %v250 = vunpack.c.h.b16 %v113
    %v251 = vpack.c.b16 %v189, %v187
    %v252 = vpack.c.b16 %v190, %v188
    %v253 = vpack.c.b16 %v193, %v191
    %v254 = vpack.c.b16 %v194, %v192
    %v255 = vpack.c.b16 %v197, %v195
    %v256 = vpack.c.b16 %v198, %v196
    %v257 = vpack.c.b16 %v201, %v199
    %v258 = vpack.c.b16 %v202, %v200
    %v259 = vpack.c.b16 %v205, %v203
    %v260 = vpack.c.b16 %v206, %v204
    %v261 = vpack.c.b16 %v209, %v207
    %v262 = vpack.c.b16 %v210, %v208
    %v263 = vpack.c.b16 %v213, %v211
    %v264 = vpack.c.b16 %v214, %v212
    %v265 = vpack.c.b16 %v217, %v215
    %v266 = vpack.c.b16 %v218, %v216
    %v267 = vpack.c.b16 %v221, %v219
    %v268 = vpack.c.b16 %v222, %v220
    %v269 = vpack.c.b16 %v225, %v223
    %v270 = vpack.c.b16 %v226, %v224
    %v271 = vpack.c.b16 %v229, %v227
    %v272 = vpack.c.b16 %v230, %v228
    %v273 = vpack.c.b16 %v233, %v231
    %v274 = vpack.c.b16 %v234, %v232
    %v275 = vpack.c.b16 %v237, %v235
    %v276 = vpack.c.b16 %v238, %v236
    %v277 = vpack.c.b16 %v241, %v239
    %v278 = vpack.c.b16 %v242, %v240
    %v279 = vpack.c.b16 %v245, %v243
    %v280 = vpack.c.b16 %v246, %v244
    %v281 = vpack.c.b16 %v249, %v247
    %v282 = vpack.c.b16 %v250, %v248
    %v347 = vunpack.c.l.b16 %v114
    %v348 = vunpack.c.h.b16 %v114
    %v349 = vunpack.c.l.b16 %v115
    %v350 = vunpack.c.h.b16 %v115
    %v351 = vunpack.c.l.b16 %v116
    %v352 = vunpack.c.h.b16 %v116
    %v353 = vunpack.c.l.b16 %v117
    %v354 = vunpack.c.h.b16 %v117
    %v355 = vunpack.c.l.b16 %v118
    %v356 = vunpack.c.h.b16 %v118
    %v357 = vunpack.c.l.b16 %v119
    %v358 = vunpack.c.h.b16 %v119
    %v359 = vunpack.c.l.b16 %v120
    %v360 = vunpack.c.h.b16 %v120
    %v361 = vunpack.c.l.b16 %v121
    %v362 = vunpack.c.h.b16 %v121
    %v363 = vunpack.c.l.b16 %v122
    %v364 = vunpack.c.h.b16 %v122
    %v365 = vunpack.c.l.b16 %v123
    %v366 = vunpack.c.h.b16 %v123
    %v367 = vunpack.c.l.b16 %v124
    %v368 = vunpack.c.h.b16 %v124
    %v369 = vunpack.c.l.b16 %v125
    %v370 = vunpack.c.h.b16 %v125
    %v371 = vunpack.c.l.b16 %v126
    %v372 = vunpack.c.h.b16 %v126
    %v373 = vunpack.c.l.b16 %v127
    %v374 = vunpack.c.h.b16 %v127
    %v375 = vunpack.c.l.b16 %v128
    %v376 = vunpack.c.h.b16 %v128
    %v377 = vunpack.c.l.b16 %v129
    %v378 = vunpack.c.h.b16 %v129
    %v379 = vunpack.c.l.b16 %v130
    %v380 = vunpack.c.h.b16 %v130
    %v381 = vunpack.c.l.b16 %v131
    %v382 = vunpack.c.h.b16 %v131
    %v383 = vunpack.c.l.b16 %v132
    %v384 = vunpack.c.h.b16 %v132
    %v385 = vunpack.c.l.b16 %v133
    %v386 = vunpack.c.h.b16 %v133
    %v387 = vunpack.c.l.b16 %v134
    %v388 = vunpack.c.h.b16 %v134
    %v389 = vunpack.c.l.b16 %v135
    %v390 = vunpack.c.h.b16 %v135
    %v391 = vunpack.c.l.b16 %v136
    %v392 = vunpack.c.h.b16 %v136
    %v393 = vunpack.c.l.b16 %v137
    %v394 = vunpack.c.h.b16 %v137
    %v395 = vunpack.c.l.b16 %v138
    %v396 = vunpack.c.h.b16 %v138
    %v397 = vunpack.c.l.b16 %v139
    %v398 = vunpack.c.h.b16 %v139
    %v399 = vunpack.c.l.b16 %v140
    %v400 = vunpack.c.h.b16 %v140
    %v401 = vunpack.c.l.b16 %v141
    %v402 = vunpack.c.h.b16 %v141
    %v403 = vunpack.c.l.b16 %v142
    %v404 = vunpack.c.h.b16 %v142
    %v405 = vunpack.c.l.b16 %v143
    %v406 = vunpack.c.h.b16 %v143
    %v407 = vunpack.c.l.b16 %v144
    %v408 = vunpack.c.h.b16 %v144
    %v409 = vunpack.c.l.b16 %v145
    %v410 = vunpack.c.h.b16 %v145
    %v411 = vpack.c.b16 %v349, %v347
    %v412 = vpack.c.b16 %v350, %v348
    %v413 = vpack.c.b16 %v353, %v351
    %v414 = vpack.c.b16 %v354, %v352
    %v415 = vpack.c.b16 %v357, %v355
    %v416 = vpack.c.b16 %v358, %v356
    %v417 = vpack.c.b16 %v361, %v359
    %v418 = vpack.c.b16 %v362, %v360
    %v419 = vpack.c.b16 %v365, %v363
    %v420 = vpack.c.b16 %v366, %v364
    %v421 = vpack.c.b16 %v369, %v367
    %v422 = vpack.c.b16 %v370, %v368
    %v423 = vpack.c.b16 %v373, %v371
    %v424 = vpack.c.b16 %v374, %v372
    %v425 = vpack.c.b16 %v377, %v375
    %v426 = vpack.c.b16 %v378, %v376
    %v427 = vpack.c.b16 %v381, %v379
    %v428 = vpack.c.b16 %v382, %v380
    %v429 = vpack.c.b16 %v385, %v383
    %v430 = vpack.c.b16 %v386, %v384
    %v431 = vpack.c.b16 %v389, %v387
    %v432 = vpack.c.b16 %v390, %v388
    %v433 = vpack.c.b16 %v393, %v391
    %v434 = vpack.c.b16 %v394, %v392
    %v435 = vpack.c.b16 %v397, %v395
    %v436 = vpack.c.b16 %v398, %v396
    %v437 = vpack.c.b16 %v401, %v399
    %v438 = vpack.c.b16 %v402, %v400
    %v439 = vpack.c.b16 %v405, %v403
    %v440 = vpack.c.b16 %v406, %v404
    %v441 = vpack.c.b16 %v409, %v407
    %v442 = vpack.c.b16 %v410, %v408
    %475 = vmatpush.bf16.msra.mxu0 %v425
    %476 = vmatpush.bf16.msra.mxu0 %v423
    %477 = vmatpush.bf16.msra.mxu0 %v421
    %478 = vmatpush.bf16.msra.mxu0 %v419
    %479 = vmatpush.bf16.msra.mxu0 %v417
    %480 = vmatpush.bf16.msra.mxu0 %v415
    %481 = vmatpush.bf16.msra.mxu0 %v413
    %482 = vmatpush.bf16.msra.mxu0 %v411
    %483 = vmatmul.bf16.gmra.mxu0 %v251
    %v484 = vpop.f32.mrf.mxu0
    %v485 = vadd.f32 %v153, %v484
    %v486 = vpop.f32.mrf.mxu0
    %v487 = vadd.f32 %v153, %v486
    %488 = vmatmul.bf16.gmra.mxu0 %v253
    %v489 = vpop.f32.mrf.mxu0
    %v490 = vadd.f32 %v153, %v489
    %v491 = vpop.f32.mrf.mxu0
    %v492 = vadd.f32 %v153, %v491
    %493 = vmatmul.bf16.gmra.mxu0 %v255
    %v494 = vpop.f32.mrf.mxu0
    %v495 = vadd.f32 %v153, %v494
    %v496 = vpop.f32.mrf.mxu0
    %v497 = vadd.f32 %v153, %v496
    %498 = vmatmul.bf16.gmra.mxu0 %v257
    %v499 = vpop.f32.mrf.mxu0
    %v500 = vadd.f32 %v153, %v499
    %v501 = vpop.f32.mrf.mxu0
    %v502 = vadd.f32 %v153, %v501
    %503 = vmatmul.bf16.gmra.mxu0 %v259
    %v504 = vpop.f32.mrf.mxu0
    %v505 = vadd.f32 %v153, %v504
    %v506 = vpop.f32.mrf.mxu0
    %v507 = vadd.f32 %v153, %v506
    %508 = vmatmul.bf16.gmra.mxu0 %v261
    %v509 = vpop.f32.mrf.mxu0
    %v510 = vadd.f32 %v153, %v509
    %v511 = vpop.f32.mrf.mxu0
    %v512 = vadd.f32 %v153, %v511
    %513 = vmatmul.bf16.gmra.mxu0 %v263
    %v514 = vpop.f32.mrf.mxu0
    %v515 = vadd.f32 %v153, %v514
    %v516 = vpop.f32.mrf.mxu0
    %v517 = vadd.f32 %v153, %v516
    %518 = vmatmul.bf16.gmra.mxu0 %v265
    %v519 = vpop.f32.mrf.mxu0
    %v520 = vadd.f32 %v153, %v519
    %v521 = vpop.f32.mrf.mxu0
    %v522 = vadd.f32 %v153, %v521
    %523 = vmatmul.bf16.gmra.mxu0 %v267
    %v524 = vpop.f32.mrf.mxu0
    %v525 = vadd.f32 %v153, %v524
    %v526 = vpop.f32.mrf.mxu0
    %v527 = vadd.f32 %v153, %v526
    %528 = vmatmul.bf16.gmra.mxu0 %v269
    %v529 = vpop.f32.mrf.mxu0
    %v530 = vadd.f32 %v153, %v529
    %v531 = vpop.f32.mrf.mxu0
    %v532 = vadd.f32 %v153, %v531
    %533 = vmatmul.bf16.gmra.mxu0 %v271
    %v534 = vpop.f32.mrf.mxu0
    %v535 = vadd.f32 %v153, %v534
    %v536 = vpop.f32.mrf.mxu0
    %v537 = vadd.f32 %v153, %v536
    %538 = vmatmul.bf16.gmra.mxu0 %v273
    %v539 = vpop.f32.mrf.mxu0
    %v540 = vadd.f32 %v153, %v539
    %v541 = vpop.f32.mrf.mxu0
    %v542 = vadd.f32 %v153, %v541
    %543 = vmatmul.bf16.gmra.mxu0 %v275
    %v544 = vpop.f32.mrf.mxu0
    %v545 = vadd.f32 %v153, %v544
    %v546 = vpop.f32.mrf.mxu0
    %v547 = vadd.f32 %v153, %v546
    %548 = vmatmul.bf16.gmra.mxu0 %v277
    %v549 = vpop.f32.mrf.mxu0
    %v550 = vadd.f32 %v153, %v549
    %v551 = vpop.f32.mrf.mxu0
    %v552 = vadd.f32 %v153, %v551
    %553 = vmatmul.bf16.gmra.mxu0 %v279
    %v554 = vpop.f32.mrf.mxu0
    %v555 = vadd.f32 %v153, %v554
    %v556 = vpop.f32.mrf.mxu0
    %v557 = vadd.f32 %v153, %v556
    %558 = vmatmul.bf16.gmra.mxu0 %v281
    %v559 = vpop.f32.mrf.mxu0
    %v560 = vadd.f32 %v153, %v559
    %v561 = vpop.f32.mrf.mxu0
    %v562 = vadd.f32 %v153, %v561
    %563 = vdwg.mxu0
    %564 = vmatpush.bf16.msra.mxu0 %v441
    %565 = vmatpush.bf16.msra.mxu0 %v439
    %566 = vmatpush.bf16.msra.mxu0 %v437
    %567 = vmatpush.bf16.msra.mxu0 %v435
    %568 = vmatpush.bf16.msra.mxu0 %v433
    %569 = vmatpush.bf16.msra.mxu0 %v431
    %570 = vmatpush.bf16.msra.mxu0 %v429
    %571 = vmatpush.bf16.msra.mxu0 %v427
    %572 = vmatmul.bf16.gmra.mxu0 %v252
    %v573 = vpop.f32.mrf.mxu0
    %v574 = vadd.f32 %v485, %v573
    %v575 = vpop.f32.mrf.mxu0
    %v576 = vadd.f32 %v487, %v575
    %577 = vmatmul.bf16.gmra.mxu0 %v254
    %v578 = vpop.f32.mrf.mxu0
    %v579 = vadd.f32 %v490, %v578
    %v580 = vpop.f32.mrf.mxu0
    %v581 = vadd.f32 %v492, %v580
    %582 = vmatmul.bf16.gmra.mxu0 %v256
    %v583 = vpop.f32.mrf.mxu0
    %v584 = vadd.f32 %v495, %v583
    %v585 = vpop.f32.mrf.mxu0
    %v586 = vadd.f32 %v497, %v585
    %587 = vmatmul.bf16.gmra.mxu0 %v258
    %v588 = vpop.f32.mrf.mxu0
    %v589 = vadd.f32 %v500, %v588
    %v590 = vpop.f32.mrf.mxu0
    %v591 = vadd.f32 %v502, %v590
    %592 = vmatmul.bf16.gmra.mxu0 %v260
    %v593 = vpop.f32.mrf.mxu0
    %v594 = vadd.f32 %v505, %v593
    %v595 = vpop.f32.mrf.mxu0
    %v596 = vadd.f32 %v507, %v595
    %597 = vmatmul.bf16.gmra.mxu0 %v262
    %v598 = vpop.f32.mrf.mxu0
    %v599 = vadd.f32 %v510, %v598
    %v600 = vpop.f32.mrf.mxu0
    %v601 = vadd.f32 %v512, %v600
    %602 = vmatmul.bf16.gmra.mxu0 %v264
    %v603 = vpop.f32.mrf.mxu0
    %v604 = vadd.f32 %v515, %v603
    %v605 = vpop.f32.mrf.mxu0
    %v606 = vadd.f32 %v517, %v605
    %607 = vmatmul.bf16.gmra.mxu0 %v266
    %v608 = vpop.f32.mrf.mxu0
    %v609 = vadd.f32 %v520, %v608
    %v610 = vpop.f32.mrf.mxu0
    %v611 = vadd.f32 %v522, %v610
    %612 = vmatmul.bf16.gmra.mxu0 %v268
    %v613 = vpop.f32.mrf.mxu0
    %v614 = vadd.f32 %v525, %v613
    %v615 = vpop.f32.mrf.mxu0
    %v616 = vadd.f32 %v527, %v615
    %617 = vmatmul.bf16.gmra.mxu0 %v270
    %v618 = vpop.f32.mrf.mxu0
    %v619 = vadd.f32 %v530, %v618
    %v620 = vpop.f32.mrf.mxu0
    %v621 = vadd.f32 %v532, %v620
    %622 = vmatmul.bf16.gmra.mxu0 %v272
    %v623 = vpop.f32.mrf.mxu0
    %v624 = vadd.f32 %v535, %v623
    %v625 = vpop.f32.mrf.mxu0
    %v626 = vadd.f32 %v537, %v625
    %627 = vmatmul.bf16.gmra.mxu0 %v274
    %v628 = vpop.f32.mrf.mxu0
    %v629 = vadd.f32 %v540, %v628
    %v630 = vpop.f32.mrf.mxu0
    %v631 = vadd.f32 %v542, %v630
    %632 = vmatmul.bf16.gmra.mxu0 %v276
    %v633 = vpop.f32.mrf.mxu0
    %v634 = vadd.f32 %v545, %v633
    %v635 = vpop.f32.mrf.mxu0
    %v636 = vadd.f32 %v547, %v635
    %637 = vmatmul.bf16.gmra.mxu0 %v278
    %v638 = vpop.f32.mrf.mxu0
    %v639 = vadd.f32 %v550, %v638
    %v640 = vpop.f32.mrf.mxu0
    %v641 = vadd.f32 %v552, %v640
    %642 = vmatmul.bf16.gmra.mxu0 %v280
    %v643 = vpop.f32.mrf.mxu0
    %v644 = vadd.f32 %v555, %v643
    %v645 = vpop.f32.mrf.mxu0
    %v646 = vadd.f32 %v557, %v645
    %647 = vmatmul.bf16.gmra.mxu0 %v282
    %v648 = vpop.f32.mrf.mxu0
    %v649 = vadd.f32 %v560, %v648
    %v650 = vpop.f32.mrf.mxu0
    %v651 = vadd.f32 %v562, %v650
    %652 = vdwg.mxu0
    %653 = vmatpush.bf16.msra.mxu0 %v426
    %654 = vmatpush.bf16.msra.mxu0 %v424
    %655 = vmatpush.bf16.msra.mxu0 %v422
    %656 = vmatpush.bf16.msra.mxu0 %v420
    %657 = vmatpush.bf16.msra.mxu0 %v418
    %658 = vmatpush.bf16.msra.mxu0 %v416
    %659 = vmatpush.bf16.msra.mxu0 %v414
    %660 = vmatpush.bf16.msra.mxu0 %v412
    %661 = vmatmul.bf16.gmra.mxu0 %v251
    %v662 = vpop.f32.mrf.mxu0
    %v663 = vadd.f32 %v154, %v662
    %v664 = vpop.f32.mrf.mxu0
    %v665 = vadd.f32 %v154, %v664
    %666 = vmatmul.bf16.gmra.mxu0 %v253
    %v667 = vpop.f32.mrf.mxu0
    %v668 = vadd.f32 %v154, %v667
    %v669 = vpop.f32.mrf.mxu0
    %v670 = vadd.f32 %v154, %v669
    %671 = vmatmul.bf16.gmra.mxu0 %v255
    %v672 = vpop.f32.mrf.mxu0
    %v673 = vadd.f32 %v154, %v672
    %v674 = vpop.f32.mrf.mxu0
    %v675 = vadd.f32 %v154, %v674
    %676 = vmatmul.bf16.gmra.mxu0 %v257
    %v677 = vpop.f32.mrf.mxu0
    %v678 = vadd.f32 %v154, %v677
    %v679 = vpop.f32.mrf.mxu0
    %v680 = vadd.f32 %v154, %v679
    %681 = vmatmul.bf16.gmra.mxu0 %v259
    %v682 = vpop.f32.mrf.mxu0
    %v683 = vadd.f32 %v154, %v682
    %v684 = vpop.f32.mrf.mxu0
    %v685 = vadd.f32 %v154, %v684
    %686 = vmatmul.bf16.gmra.mxu0 %v261
    %v687 = vpop.f32.mrf.mxu0
    %v688 = vadd.f32 %v154, %v687
    %v689 = vpop.f32.mrf.mxu0
    %v690 = vadd.f32 %v154, %v689
    %691 = vmatmul.bf16.gmra.mxu0 %v263
    %v692 = vpop.f32.mrf.mxu0
    %v693 = vadd.f32 %v154, %v692
    %v694 = vpop.f32.mrf.mxu0
    %v695 = vadd.f32 %v154, %v694
    %696 = vmatmul.bf16.gmra.mxu0 %v265
    %v697 = vpop.f32.mrf.mxu0
    %v698 = vadd.f32 %v154, %v697
    %v699 = vpop.f32.mrf.mxu0
    %v700 = vadd.f32 %v154, %v699
    %701 = vmatmul.bf16.gmra.mxu0 %v267
    %v702 = vpop.f32.mrf.mxu0
    %v703 = vadd.f32 %v154, %v702
    %v704 = vpop.f32.mrf.mxu0
    %v705 = vadd.f32 %v154, %v704
    %706 = vmatmul.bf16.gmra.mxu0 %v269
    %v707 = vpop.f32.mrf.mxu0
    %v708 = vadd.f32 %v154, %v707
    %v709 = vpop.f32.mrf.mxu0
    %v710 = vadd.f32 %v154, %v709
    %711 = vmatmul.bf16.gmra.mxu0 %v271
    %v712 = vpop.f32.mrf.mxu0
    %v713 = vadd.f32 %v154, %v712
    %v714 = vpop.f32.mrf.mxu0
    %v715 = vadd.f32 %v154, %v714
    %716 = vmatmul.bf16.gmra.mxu0 %v273
    %v717 = vpop.f32.mrf.mxu0
    %v718 = vadd.f32 %v154, %v717
    %v719 = vpop.f32.mrf.mxu0
    %v720 = vadd.f32 %v154, %v719
    %721 = vmatmul.bf16.gmra.mxu0 %v275
    %v722 = vpop.f32.mrf.mxu0
    %v723 = vadd.f32 %v154, %v722
    %v724 = vpop.f32.mrf.mxu0
    %v725 = vadd.f32 %v154, %v724
    %726 = vmatmul.bf16.gmra.mxu0 %v277
    %v727 = vpop.f32.mrf.mxu0
    %v728 = vadd.f32 %v154, %v727
    %v729 = vpop.f32.mrf.mxu0
    %v730 = vadd.f32 %v154, %v729
    %731 = vmatmul.bf16.gmra.mxu0 %v279
    %v732 = vpop.f32.mrf.mxu0
    %v733 = vadd.f32 %v154, %v732
    %v734 = vpop.f32.mrf.mxu0
    %v735 = vadd.f32 %v154, %v734
    %736 = vmatmul.bf16.gmra.mxu0 %v281
    %v737 = vpop.f32.mrf.mxu0
    %v738 = vadd.f32 %v154, %v737
    %v739 = vpop.f32.mrf.mxu0
    %v740 = vadd.f32 %v154, %v739
    %741 = vdwg.mxu0
    %742 = vmatpush.bf16.msra.mxu0 %v442
    %743 = vmatpush.bf16.msra.mxu0 %v440
    %744 = vmatpush.bf16.msra.mxu0 %v438
    %745 = vmatpush.bf16.msra.mxu0 %v436
    %746 = vmatpush.bf16.msra.mxu0 %v434
    %747 = vmatpush.bf16.msra.mxu0 %v432
    %748 = vmatpush.bf16.msra.mxu0 %v430
    %749 = vmatpush.bf16.msra.mxu0 %v428
    %750 = vmatmul.bf16.gmra.mxu0 %v252
    %v751 = vpop.f32.mrf.mxu0
    %v752 = vadd.f32 %v663, %v751
    %v753 = vpop.f32.mrf.mxu0
    %v754 = vadd.f32 %v665, %v753
    %755 = vmatmul.bf16.gmra.mxu0 %v254
    %v756 = vpop.f32.mrf.mxu0
    %v757 = vadd.f32 %v668, %v756
    %v758 = vpop.f32.mrf.mxu0
    %v759 = vadd.f32 %v670, %v758
    %760 = vmatmul.bf16.gmra.mxu0 %v256
    %v761 = vpop.f32.mrf.mxu0
    %v762 = vadd.f32 %v673, %v761
    %v763 = vpop.f32.mrf.mxu0
    %v764 = vadd.f32 %v675, %v763
    %765 = vmatmul.bf16.gmra.mxu0 %v258
    %v766 = vpop.f32.mrf.mxu0
    %v767 = vadd.f32 %v678, %v766
    %v768 = vpop.f32.mrf.mxu0
    %v769 = vadd.f32 %v680, %v768
    %770 = vmatmul.bf16.gmra.mxu0 %v260
    %v771 = vpop.f32.mrf.mxu0
    %v772 = vadd.f32 %v683, %v771
    %v773 = vpop.f32.mrf.mxu0
    %v774 = vadd.f32 %v685, %v773
    %775 = vmatmul.bf16.gmra.mxu0 %v262
    %v776 = vpop.f32.mrf.mxu0
    %v777 = vadd.f32 %v688, %v776
    %v778 = vpop.f32.mrf.mxu0
    %v779 = vadd.f32 %v690, %v778
    %780 = vmatmul.bf16.gmra.mxu0 %v264
    %v781 = vpop.f32.mrf.mxu0
    %v782 = vadd.f32 %v693, %v781
    %v783 = vpop.f32.mrf.mxu0
    %v784 = vadd.f32 %v695, %v783
    %785 = vmatmul.bf16.gmra.mxu0 %v266
    %v786 = vpop.f32.mrf.mxu0
    %v787 = vadd.f32 %v698, %v786
    %v788 = vpop.f32.mrf.mxu0
    %v789 = vadd.f32 %v700, %v788
    %790 = vmatmul.bf16.gmra.mxu0 %v268
    %v791 = vpop.f32.mrf.mxu0
    %v792 = vadd.f32 %v703, %v791
    %v793 = vpop.f32.mrf.mxu0
    %v794 = vadd.f32 %v705, %v793
    %795 = vmatmul.bf16.gmra.mxu0 %v270
    %v796 = vpop.f32.mrf.mxu0
    %v797 = vadd.f32 %v708, %v796
    %v798 = vpop.f32.mrf.mxu0
    %v799 = vadd.f32 %v710, %v798
    %800 = vmatmul.bf16.gmra.mxu0 %v272
    %v801 = vpop.f32.mrf.mxu0
    %v802 = vadd.f32 %v713, %v801
    %v803 = vpop.f32.mrf.mxu0
    %v804 = vadd.f32 %v715, %v803
    %805 = vmatmul.bf16.gmra.mxu0 %v274
    %v806 = vpop.f32.mrf.mxu0
    %v807 = vadd.f32 %v718, %v806
    %v808 = vpop.f32.mrf.mxu0
    %v809 = vadd.f32 %v720, %v808
    %810 = vmatmul.bf16.gmra.mxu0 %v276
    %v811 = vpop.f32.mrf.mxu0
    %v812 = vadd.f32 %v723, %v811
    %v813 = vpop.f32.mrf.mxu0
    %v814 = vadd.f32 %v725, %v813
    %815 = vmatmul.bf16.gmra.mxu0 %v278
    %v816 = vpop.f32.mrf.mxu0
    %v817 = vadd.f32 %v728, %v816
    %v818 = vpop.f32.mrf.mxu0
    %v819 = vadd.f32 %v730, %v818
    %820 = vmatmul.bf16.gmra.mxu0 %v280
    %v821 = vpop.f32.mrf.mxu0
    %v822 = vadd.f32 %v733, %v821
    %v823 = vpop.f32.mrf.mxu0
    %v824 = vadd.f32 %v735, %v823
    %825 = vmatmul.bf16.gmra.mxu0 %v282
    %v826 = vpop.f32.mrf.mxu0
    %v827 = vadd.f32 %v738, %v826
    %v828 = vpop.f32.mrf.mxu0
    %v829 = vadd.f32 %v740, %v828
    %830 = vdwg.mxu0
    %v831 = vmax.f32 %v574, 0.0
    %v832 = vmax.f32 %v752, 0.0
    %v833 = vmax.f32 %v576, 0.0
    %v834 = vmax.f32 %v754, 0.0
    %v835 = vmax.f32 %v579, 0.0
    %v836 = vmax.f32 %v757, 0.0
    %v837 = vmax.f32 %v581, 0.0
    %v838 = vmax.f32 %v759, 0.0
    %v839 = vmax.f32 %v584, 0.0
    %v840 = vmax.f32 %v762, 0.0
    %v841 = vmax.f32 %v586, 0.0
    %v842 = vmax.f32 %v764, 0.0
    %v843 = vmax.f32 %v589, 0.0
    %v844 = vmax.f32 %v767, 0.0
    %v845 = vmax.f32 %v591, 0.0
    %v846 = vmax.f32 %v769, 0.0
    %v847 = vmax.f32 %v594, 0.0
    %v848 = vmax.f32 %v772, 0.0
    %v849 = vmax.f32 %v596, 0.0
    %v850 = vmax.f32 %v774, 0.0
    %v851 = vmax.f32 %v599, 0.0
    %v852 = vmax.f32 %v777, 0.0
    %v853 = vmax.f32 %v601, 0.0
    %v854 = vmax.f32 %v779, 0.0
    %v855 = vmax.f32 %v604, 0.0
    %v856 = vmax.f32 %v782, 0.0
    %v857 = vmax.f32 %v606, 0.0
    %v858 = vmax.f32 %v784, 0.0
    %v859 = vmax.f32 %v609, 0.0
    %v860 = vmax.f32 %v787, 0.0
    %v861 = vmax.f32 %v611, 0.0
    %v862 = vmax.f32 %v789, 0.0
    %v863 = vmax.f32 %v614, 0.0
    %v864 = vmax.f32 %v792, 0.0
    %v865 = vmax.f32 %v616, 0.0
    %v866 = vmax.f32 %v794, 0.0
    %v867 = vmax.f32 %v619, 0.0
    %v868 = vmax.f32 %v797, 0.0
    %v869 = vmax.f32 %v621, 0.0
    %v870 = vmax.f32 %v799, 0.0
    %v871 = vmax.f32 %v624, 0.0
    %v872 = vmax.f32 %v802, 0.0
    %v873 = vmax.f32 %v626, 0.0
    %v874 = vmax.f32 %v804, 0.0
    %v875 = vmax.f32 %v629, 0.0
    %v876 = vmax.f32 %v807, 0.0
    %v877 = vmax.f32 %v631, 0.0
    %v878 = vmax.f32 %v809, 0.0
    %v879 = vmax.f32 %v634, 0.0
    %v880 = vmax.f32 %v812, 0.0
    %v881 = vmax.f32 %v636, 0.0
    %v882 = vmax.f32 %v814, 0.0
    %v883 = vmax.f32 %v639, 0.0
    %v884 = vmax.f32 %v817, 0.0
    %v885 = vmax.f32 %v641, 0.0
    %v886 = vmax.f32 %v819, 0.0
    %v887 = vmax.f32 %v644, 0.0
    %v888 = vmax.f32 %v822, 0.0
    %v889 = vmax.f32 %v646, 0.0
    %v890 = vmax.f32 %v824, 0.0
    %v891 = vmax.f32 %v649, 0.0
    %v892 = vmax.f32 %v827, 0.0
    %v893 = vmax.f32 %v651, 0.0
    %v894 = vmax.f32 %v829, 0.0
    %v895 = vpack.c.bf16 %v833, %v831
    %v896 = vpack.c.bf16 %v834, %v832
    %v897 = vpack.c.bf16 %v837, %v835
    %v898 = vpack.c.bf16 %v838, %v836
    %v899 = vpack.c.bf16 %v841, %v839
    %v900 = vpack.c.bf16 %v842, %v840
    %v901 = vpack.c.bf16 %v845, %v843
    %v902 = vpack.c.bf16 %v846, %v844
    %v903 = vpack.c.bf16 %v849, %v847
    %v904 = vpack.c.bf16 %v850, %v848
    %v905 = vpack.c.bf16 %v853, %v851
    %v906 = vpack.c.bf16 %v854, %v852
    %v907 = vpack.c.bf16 %v857, %v855
    %v908 = vpack.c.bf16 %v858, %v856
    %v909 = vpack.c.bf16 %v861, %v859
    %v910 = vpack.c.bf16 %v862, %v860
    %v911 = vpack.c.bf16 %v865, %v863
    %v912 = vpack.c.bf16 %v866, %v864
    %v913 = vpack.c.bf16 %v869, %v867
    %v914 = vpack.c.bf16 %v870, %v868
    %v915 = vpack.c.bf16 %v873, %v871
    %v916 = vpack.c.bf16 %v874, %v872
    %v917 = vpack.c.bf16 %v877, %v875
    %v918 = vpack.c.bf16 %v878, %v876
    %v919 = vpack.c.bf16 %v881, %v879
    %v920 = vpack.c.bf16 %v882, %v880
    %v921 = vpack.c.bf16 %v885, %v883
    %v922 = vpack.c.bf16 %v886, %v884
    %v923 = vpack.c.bf16 %v889, %v887
    %v924 = vpack.c.bf16 %v890, %v888
    %v925 = vpack.c.bf16 %v893, %v891
    %v926 = vpack.c.bf16 %v894, %v892
    %v927 = vld [vmem:[#allocation8] sm:$0xff]
    %v928 = vld [vmem:[#allocation8 + $0x8] sm:$0xff]
    %v929 = vld [vmem:[#allocation8 + $0x10] sm:$0xff]
    %v930 = vld [vmem:[#allocation8 + $0x18] sm:$0xff]
    %v931 = vld [vmem:[#allocation8 + $0x20] sm:$0xff]
    %v932 = vld [vmem:[#allocation8 + $0x28] sm:$0xff]
    %v933 = vld [vmem:[#allocation8 + $0x30] sm:$0xff]
    %v934 = vld [vmem:[#allocation8 + $0x38] sm:$0xff]
    %v935 = vld [vmem:[#allocation8 + $0x40] sm:$0xff]
    %v936 = vld [vmem:[#allocation8 + $0x48] sm:$0xff]
    %v937 = vld [vmem:[#allocation8 + $0x50] sm:$0xff]
    %v938 = vld [vmem:[#allocation8 + $0x58] sm:$0xff]
    %v939 = vld [vmem:[#allocation8 + $0x60] sm:$0xff]
    %v940 = vld [vmem:[#allocation8 + $0x68] sm:$0xff]
    %v941 = vld [vmem:[#allocation8 + $0x70] sm:$0xff]
    %v942 = vld [vmem:[#allocation8 + $0x78] sm:$0xff]
    %v943 = vld [vmem:[#allocation8 + $0x80] sm:$0xff]
    %v944 = vld [vmem:[#allocation8 + $0x88] sm:$0xff]
    %v945 = vld [vmem:[#allocation8 + $0x90] sm:$0xff]
    %v946 = vld [vmem:[#allocation8 + $0x98] sm:$0xff]
    %v947 = vld [vmem:[#allocation8 + $0xa0] sm:$0xff]
    %v948 = vld [vmem:[#allocation8 + $0xa8] sm:$0xff]
    %v949 = vld [vmem:[#allocation8 + $0xb0] sm:$0xff]
    %v950 = vld [vmem:[#allocation8 + $0xb8] sm:$0xff]
    %v951 = vld [vmem:[#allocation8 + $0xc0] sm:$0xff]
    %v952 = vld [vmem:[#allocation8 + $0xc8] sm:$0xff]
    %v953 = vld [vmem:[#allocation8 + $0xd0] sm:$0xff]
    %v954 = vld [vmem:[#allocation8 + $0xd8] sm:$0xff]
    %v955 = vld [vmem:[#allocation8 + $0xe0] sm:$0xff]
    %v956 = vld [vmem:[#allocation8 + $0xe8] sm:$0xff]
    %v957 = vld [vmem:[#allocation8 + $0xf0] sm:$0xff]
    %v958 = vld [vmem:[#allocation8 + $0xf8] sm:$0xff]
    %v959 = vld [vmem:[%s4] sm:$0x3]
    %v960 = vunpack.c.l.bf16 %v959
    %v962 = vperm.slane %v960, 0
    %v963 = vperm.slane %v960, 2
    %v966 = vperm.slane %v962, 0
    %v967 = vperm.slane %v963, 0
    %v1000 = vunpack.c.l.b16 %v927
    %v1001 = vunpack.c.h.b16 %v927
    %v1002 = vunpack.c.l.b16 %v928
    %v1003 = vunpack.c.h.b16 %v928
    %v1004 = vunpack.c.l.b16 %v929
    %v1005 = vunpack.c.h.b16 %v929
    %v1006 = vunpack.c.l.b16 %v930
    %v1007 = vunpack.c.h.b16 %v930
    %v1008 = vunpack.c.l.b16 %v931
    %v1009 = vunpack.c.h.b16 %v931
    %v1010 = vunpack.c.l.b16 %v932
    %v1011 = vunpack.c.h.b16 %v932
    %v1012 = vunpack.c.l.b16 %v933
    %v1013 = vunpack.c.h.b16 %v933
    %v1014 = vunpack.c.l.b16 %v934
    %v1015 = vunpack.c.h.b16 %v934
    %v1016 = vunpack.c.l.b16 %v935
    %v1017 = vunpack.c.h.b16 %v935
    %v1018 = vunpack.c.l.b16 %v936
    %v1019 = vunpack.c.h.b16 %v936
    %v1020 = vunpack.c.l.b16 %v937
    %v1021 = vunpack.c.h.b16 %v937
    %v1022 = vunpack.c.l.b16 %v938
    %v1023 = vunpack.c.h.b16 %v938
    %v1024 = vunpack.c.l.b16 %v939
    %v1025 = vunpack.c.h.b16 %v939
    %v1026 = vunpack.c.l.b16 %v940
    %v1027 = vunpack.c.h.b16 %v940
    %v1028 = vunpack.c.l.b16 %v941
    %v1029 = vunpack.c.h.b16 %v941
    %v1030 = vunpack.c.l.b16 %v942
    %v1031 = vunpack.c.h.b16 %v942
    %v1032 = vunpack.c.l.b16 %v943
    %v1033 = vunpack.c.h.b16 %v943
    %v1034 = vunpack.c.l.b16 %v944
    %v1035 = vunpack.c.h.b16 %v944
    %v1036 = vunpack.c.l.b16 %v945
    %v1037 = vunpack.c.h.b16 %v945
    %v1038 = vunpack.c.l.b16 %v946
    %v1039 = vunpack.c.h.b16 %v946
    %v1040 = vunpack.c.l.b16 %v947
    %v1041 = vunpack.c.h.b16 %v947
    %v1042 = vunpack.c.l.b16 %v948
    %v1043 = vunpack.c.h.b16 %v948
    %v1044 = vunpack.c.l.b16 %v949
    %v1045 = vunpack.c.h.b16 %v949
    %v1046 = vunpack.c.l.b16 %v950
    %v1047 = vunpack.c.h.b16 %v950
    %v1048 = vunpack.c.l.b16 %v951
    %v1049 = vunpack.c.h.b16 %v951
    %v1050 = vunpack.c.l.b16 %v952
    %v1051 = vunpack.c.h.b16 %v952
    %v1052 = vunpack.c.l.b16 %v953
    %v1053 = vunpack.c.h.b16 %v953
    %v1054 = vunpack.c.l.b16 %v954
    %v1055 = vunpack.c.h.b16 %v954
    %v1056 = vunpack.c.l.b16 %v955
    %v1057 = vunpack.c.h.b16 %v955
    %v1058 = vunpack.c.l.b16 %v956
    %v1059 = vunpack.c.h.b16 %v956
    %v1060 = vunpack.c.l.b16 %v957
    %v1061 = vunpack.c.h.b16 %v957
    %v1062 = vunpack.c.l.b16 %v958
    %v1063 = vunpack.c.h.b16 %v958
    %v1064 = vpack.c.b16 %v1002, %v1000
    %v1065 = vpack.c.b16 %v1003, %v1001
    %v1066 = vpack.c.b16 %v1006, %v1004
    %v1067 = vpack.c.b16 %v1007, %v1005
    %v1068 = vpack.c.b16 %v1010, %v1008
    %v1069 = vpack.c.b16 %v1011, %v1009
    %v1070 = vpack.c.b16 %v1014, %v1012
    %v1071 = vpack.c.b16 %v1015, %v1013
    %v1072 = vpack.c.b16 %v1018, %v1016
    %v1073 = vpack.c.b16 %v1019, %v1017
    %v1074 = vpack.c.b16 %v1022, %v1020
    %v1075 = vpack.c.b16 %v1023, %v1021
    %v1076 = vpack.c.b16 %v1026, %v1024
    %v1077 = vpack.c.b16 %v1027, %v1025
    %v1078 = vpack.c.b16 %v1030, %v1028
    %v1079 = vpack.c.b16 %v1031, %v1029
    %v1080 = vpack.c.b16 %v1034, %v1032
    %v1081 = vpack.c.b16 %v1035, %v1033
    %v1082 = vpack.c.b16 %v1038, %v1036
    %v1083 = vpack.c.b16 %v1039, %v1037
    %v1084 = vpack.c.b16 %v1042, %v1040
    %v1085 = vpack.c.b16 %v1043, %v1041
    %v1086 = vpack.c.b16 %v1046, %v1044
    %v1087 = vpack.c.b16 %v1047, %v1045
    %v1088 = vpack.c.b16 %v1050, %v1048
    %v1089 = vpack.c.b16 %v1051, %v1049
    %v1090 = vpack.c.b16 %v1054, %v1052
    %v1091 = vpack.c.b16 %v1055, %v1053
    %v1092 = vpack.c.b16 %v1058, %v1056
    %v1093 = vpack.c.b16 %v1059, %v1057
    %v1094 = vpack.c.b16 %v1062, %v1060
    %v1095 = vpack.c.b16 %v1063, %v1061
    %1128 = vmatpush.bf16.msra.mxu0 %v1078
    %1129 = vmatpush.bf16.msra.mxu0 %v1076
    %1130 = vmatpush.bf16.msra.mxu0 %v1074
    %1131 = vmatpush.bf16.msra.mxu0 %v1072
    %1132 = vmatpush.bf16.msra.mxu0 %v1070
    %1133 = vmatpush.bf16.msra.mxu0 %v1068
    %1134 = vmatpush.bf16.msra.mxu0 %v1066
    %1135 = vmatpush.bf16.msra.mxu0 %v1064
    %1136 = vmatmul.bf16.gmra.mxu0 %v895
    %v1137 = vpop.f32.mrf.mxu0
    %v1138 = vadd.f32 %v966, %v1137
    %v1139 = vpop.f32.mrf.mxu0
    %v1140 = vadd.f32 %v966, %v1139
    %1141 = vmatmul.bf16.gmra.mxu0 %v897
    %v1142 = vpop.f32.mrf.mxu0
    %v1143 = vadd.f32 %v966, %v1142
    %v1144 = vpop.f32.mrf.mxu0
    %v1145 = vadd.f32 %v966, %v1144
    %1146 = vmatmul.bf16.gmra.mxu0 %v899
    %v1147 = vpop.f32.mrf.mxu0
    %v1148 = vadd.f32 %v966, %v1147
    %v1149 = vpop.f32.mrf.mxu0
    %v1150 = vadd.f32 %v966, %v1149
    %1151 = vmatmul.bf16.gmra.mxu0 %v901
    %v1152 = vpop.f32.mrf.mxu0
    %v1153 = vadd.f32 %v966, %v1152
    %v1154 = vpop.f32.mrf.mxu0
    %v1155 = vadd.f32 %v966, %v1154
    %1156 = vmatmul.bf16.gmra.mxu0 %v903
    %v1157 = vpop.f32.mrf.mxu0
    %v1158 = vadd.f32 %v966, %v1157
    %v1159 = vpop.f32.mrf.mxu0
    %v1160 = vadd.f32 %v966, %v1159
    %1161 = vmatmul.bf16.gmra.mxu0 %v905
    %v1162 = vpop.f32.mrf.mxu0
    %v1163 = vadd.f32 %v966, %v1162
    %v1164 = vpop.f32.mrf.mxu0
    %v1165 = vadd.f32 %v966, %v1164
    %1166 = vmatmul.bf16.gmra.mxu0 %v907
    %v1167 = vpop.f32.mrf.mxu0
    %v1168 = vadd.f32 %v966, %v1167
    %v1169 = vpop.f32.mrf.mxu0
    %v1170 = vadd.f32 %v966, %v1169
    %1171 = vmatmul.bf16.gmra.mxu0 %v909
    %v1172 = vpop.f32.mrf.mxu0
    %v1173 = vadd.f32 %v966, %v1172
    %v1174 = vpop.f32.mrf.mxu0
    %v1175 = vadd.f32 %v966, %v1174
    %1176 = vmatmul.bf16.gmra.mxu0 %v911
    %v1177 = vpop.f32.mrf.mxu0
    %v1178 = vadd.f32 %v966, %v1177
    %v1179 = vpop.f32.mrf.mxu0
    %v1180 = vadd.f32 %v966, %v1179
    %1181 = vmatmul.bf16.gmra.mxu0 %v913
    %v1182 = vpop.f32.mrf.mxu0
    %v1183 = vadd.f32 %v966, %v1182
    %v1184 = vpop.f32.mrf.mxu0
    %v1185 = vadd.f32 %v966, %v1184
    %1186 = vmatmul.bf16.gmra.mxu0 %v915
    %v1187 = vpop.f32.mrf.mxu0
    %v1188 = vadd.f32 %v966, %v1187
    %v1189 = vpop.f32.mrf.mxu0
    %v1190 = vadd.f32 %v966, %v1189
    %1191 = vmatmul.bf16.gmra.mxu0 %v917
    %v1192 = vpop.f32.mrf.mxu0
    %v1193 = vadd.f32 %v966, %v1192
    %v1194 = vpop.f32.mrf.mxu0
    %v1195 = vadd.f32 %v966, %v1194
    %1196 = vmatmul.bf16.gmra.mxu0 %v919
    %v1197 = vpop.f32.mrf.mxu0
    %v1198 = vadd.f32 %v966, %v1197
    %v1199 = vpop.f32.mrf.mxu0
    %v1200 = vadd.f32 %v966, %v1199
    %1201 = vmatmul.bf16.gmra.mxu0 %v921
    %v1202 = vpop.f32.mrf.mxu0
    %v1203 = vadd.f32 %v966, %v1202
    %v1204 = vpop.f32.mrf.mxu0
    %v1205 = vadd.f32 %v966, %v1204
    %1206 = vmatmul.bf16.gmra.mxu0 %v923
    %v1207 = vpop.f32.mrf.mxu0
    %v1208 = vadd.f32 %v966, %v1207
    %v1209 = vpop.f32.mrf.mxu0
    %v1210 = vadd.f32 %v966, %v1209
    %1211 = vmatmul.bf16.gmra.mxu0 %v925
    %v1212 = vpop.f32.mrf.mxu0
    %v1213 = vadd.f32 %v966, %v1212
    %v1214 = vpop.f32.mrf.mxu0
    %v1215 = vadd.f32 %v966, %v1214
    %1216 = vdwg.mxu0
    %1217 = vmatpush.bf16.msra.mxu0 %v1094
    %1218 = vmatpush.bf16.msra.mxu0 %v1092
    %1219 = vmatpush.bf16.msra.mxu0 %v1090
    %1220 = vmatpush.bf16.msra.mxu0 %v1088
    %1221 = vmatpush.bf16.msra.mxu0 %v1086
    %1222 = vmatpush.bf16.msra.mxu0 %v1084
    %1223 = vmatpush.bf16.msra.mxu0 %v1082
    %1224 = vmatpush.bf16.msra.mxu0 %v1080
    %1225 = vmatmul.bf16.gmra.mxu0 %v896
    %v1226 = vpop.f32.mrf.mxu0
    %v1227 = vadd.f32 %v1138, %v1226
    %v1228 = vpop.f32.mrf.mxu0
    %v1229 = vadd.f32 %v1140, %v1228
    %1230 = vmatmul.bf16.gmra.mxu0 %v898
    %v1231 = vpop.f32.mrf.mxu0
    %v1232 = vadd.f32 %v1143, %v1231
    %v1233 = vpop.f32.mrf.mxu0
    %v1234 = vadd.f32 %v1145, %v1233
    %1235 = vmatmul.bf16.gmra.mxu0 %v900
    %v1236 = vpop.f32.mrf.mxu0
    %v1237 = vadd.f32 %v1148, %v1236
    %v1238 = vpop.f32.mrf.mxu0
    %v1239 = vadd.f32 %v1150, %v1238
    %1240 = vmatmul.bf16.gmra.mxu0 %v902
    %v1241 = vpop.f32.mrf.mxu0
    %v1242 = vadd.f32 %v1153, %v1241
    %v1243 = vpop.f32.mrf.mxu0
    %v1244 = vadd.f32 %v1155, %v1243
    %1245 = vmatmul.bf16.gmra.mxu0 %v904
    %v1246 = vpop.f32.mrf.mxu0
    %v1247 = vadd.f32 %v1158, %v1246
    %v1248 = vpop.f32.mrf.mxu0
    %v1249 = vadd.f32 %v1160, %v1248
    %1250 = vmatmul.bf16.gmra.mxu0 %v906
    %v1251 = vpop.f32.mrf.mxu0
    %v1252 = vadd.f32 %v1163, %v1251
    %v1253 = vpop.f32.mrf.mxu0
    %v1254 = vadd.f32 %v1165, %v1253
    %1255 = vmatmul.bf16.gmra.mxu0 %v908
    %v1256 = vpop.f32.mrf.mxu0
    %v1257 = vadd.f32 %v1168, %v1256
    %v1258 = vpop.f32.mrf.mxu0
    %v1259 = vadd.f32 %v1170, %v1258
    %1260 = vmatmul.bf16.gmra.mxu0 %v910
    %v1261 = vpop.f32.mrf.mxu0
    %v1262 = vadd.f32 %v1173, %v1261
    %v1263 = vpop.f32.mrf.mxu0
    %v1264 = vadd.f32 %v1175, %v1263
    %1265 = vmatmul.bf16.gmra.mxu0 %v912
    %v1266 = vpop.f32.mrf.mxu0
    %v1267 = vadd.f32 %v1178, %v1266
    %v1268 = vpop.f32.mrf.mxu0
    %v1269 = vadd.f32 %v1180, %v1268
    %1270 = vmatmul.bf16.gmra.mxu0 %v914
    %v1271 = vpop.f32.mrf.mxu0
    %v1272 = vadd.f32 %v1183, %v1271
    %v1273 = vpop.f32.mrf.mxu0
    %v1274 = vadd.f32 %v1185, %v1273
    %1275 = vmatmul.bf16.gmra.mxu0 %v916
    %v1276 = vpop.f32.mrf.mxu0
    %v1277 = vadd.f32 %v1188, %v1276
    %v1278 = vpop.f32.mrf.mxu0
    %v1279 = vadd.f32 %v1190, %v1278
    %1280 = vmatmul.bf16.gmra.mxu0 %v918
    %v1281 = vpop.f32.mrf.mxu0
    %v1282 = vadd.f32 %v1193, %v1281
    %v1283 = vpop.f32.mrf.mxu0
    %v1284 = vadd.f32 %v1195, %v1283
    %1285 = vmatmul.bf16.gmra.mxu0 %v920
    %v1286 = vpop.f32.mrf.mxu0
    %v1287 = vadd.f32 %v1198, %v1286
    %v1288 = vpop.f32.mrf.mxu0
    %v1289 = vadd.f32 %v1200, %v1288
    %1290 = vmatmul.bf16.gmra.mxu0 %v922
    %v1291 = vpop.f32.mrf.mxu0
    %v1292 = vadd.f32 %v1203, %v1291
    %v1293 = vpop.f32.mrf.mxu0
    %v1294 = vadd.f32 %v1205, %v1293
    %1295 = vmatmul.bf16.gmra.mxu0 %v924
    %v1296 = vpop.f32.mrf.mxu0
    %v1297 = vadd.f32 %v1208, %v1296
    %v1298 = vpop.f32.mrf.mxu0
    %v1299 = vadd.f32 %v1210, %v1298
    %1300 = vmatmul.bf16.gmra.mxu0 %v926
    %v1301 = vpop.f32.mrf.mxu0
    %v1302 = vadd.f32 %v1213, %v1301
    %v1303 = vpop.f32.mrf.mxu0
    %v1304 = vadd.f32 %v1215, %v1303
    %1305 = vdwg.mxu0
    %1306 = vmatpush.bf16.msra.mxu0 %v1079
    %1307 = vmatpush.bf16.msra.mxu0 %v1077
    %1308 = vmatpush.bf16.msra.mxu0 %v1075
    %1309 = vmatpush.bf16.msra.mxu0 %v1073
    %1310 = vmatpush.bf16.msra.mxu0 %v1071
    %1311 = vmatpush.bf16.msra.mxu0 %v1069
    %1312 = vmatpush.bf16.msra.mxu0 %v1067
    %1313 = vmatpush.bf16.msra.mxu0 %v1065
    %1314 = vmatmul.bf16.gmra.mxu0 %v895
    %v1315 = vpop.f32.mrf.mxu0
    %v1316 = vadd.f32 %v967, %v1315
    %v1317 = vpop.f32.mrf.mxu0
    %v1318 = vadd.f32 %v967, %v1317
    %1319 = vmatmul.bf16.gmra.mxu0 %v897
    %v1320 = vpop.f32.mrf.mxu0
    %v1321 = vadd.f32 %v967, %v1320
    %v1322 = vpop.f32.mrf.mxu0
    %v1323 = vadd.f32 %v967, %v1322
    %1324 = vmatmul.bf16.gmra.mxu0 %v899
    %v1325 = vpop.f32.mrf.mxu0
    %v1326 = vadd.f32 %v967, %v1325
    %v1327 = vpop.f32.mrf.mxu0
    %v1328 = vadd.f32 %v967, %v1327
    %1329 = vmatmul.bf16.gmra.mxu0 %v901
    %v1330 = vpop.f32.mrf.mxu0
    %v1331 = vadd.f32 %v967, %v1330
    %v1332 = vpop.f32.mrf.mxu0
    %v1333 = vadd.f32 %v967, %v1332
    %1334 = vmatmul.bf16.gmra.mxu0 %v903
    %v1335 = vpop.f32.mrf.mxu0
    %v1336 = vadd.f32 %v967, %v1335
    %v1337 = vpop.f32.mrf.mxu0
    %v1338 = vadd.f32 %v967, %v1337
    %1339 = vmatmul.bf16.gmra.mxu0 %v905
    %v1340 = vpop.f32.mrf.mxu0
    %v1341 = vadd.f32 %v967, %v1340
    %v1342 = vpop.f32.mrf.mxu0
    %v1343 = vadd.f32 %v967, %v1342
    %1344 = vmatmul.bf16.gmra.mxu0 %v907
    %v1345 = vpop.f32.mrf.mxu0
    %v1346 = vadd.f32 %v967, %v1345
    %v1347 = vpop.f32.mrf.mxu0
    %v1348 = vadd.f32 %v967, %v1347
    %1349 = vmatmul.bf16.gmra.mxu0 %v909
    %v1350 = vpop.f32.mrf.mxu0
    %v1351 = vadd.f32 %v967, %v1350
    %v1352 = vpop.f32.mrf.mxu0
    %v1353 = vadd.f32 %v967, %v1352
    %1354 = vmatmul.bf16.gmra.mxu0 %v911
    %v1355 = vpop.f32.mrf.mxu0
    %v1356 = vadd.f32 %v967, %v1355
    %v1357 = vpop.f32.mrf.mxu0
    %v1358 = vadd.f32 %v967, %v1357
    %1359 = vmatmul.bf16.gmra.mxu0 %v913
    %v1360 = vpop.f32.mrf.mxu0
    %v1361 = vadd.f32 %v967, %v1360
    %v1362 = vpop.f32.mrf.mxu0
    %v1363 = vadd.f32 %v967, %v1362
    %1364 = vmatmul.bf16.gmra.mxu0 %v915
    %v1365 = vpop.f32.mrf.mxu0
    %v1366 = vadd.f32 %v967, %v1365
    %v1367 = vpop.f32.mrf.mxu0
    %v1368 = vadd.f32 %v967, %v1367
    %1369 = vmatmul.bf16.gmra.mxu0 %v917
    %v1370 = vpop.f32.mrf.mxu0
    %v1371 = vadd.f32 %v967, %v1370
    %v1372 = vpop.f32.mrf.mxu0
    %v1373 = vadd.f32 %v967, %v1372
    %1374 = vmatmul.bf16.gmra.mxu0 %v919
    %v1375 = vpop.f32.mrf.mxu0
    %v1376 = vadd.f32 %v967, %v1375
    %v1377 = vpop.f32.mrf.mxu0
    %v1378 = vadd.f32 %v967, %v1377
    %1379 = vmatmul.bf16.gmra.mxu0 %v921
    %v1380 = vpop.f32.mrf.mxu0
    %v1381 = vadd.f32 %v967, %v1380
    %v1382 = vpop.f32.mrf.mxu0
    %v1383 = vadd.f32 %v967, %v1382
    %1384 = vmatmul.bf16.gmra.mxu0 %v923
    %v1385 = vpop.f32.mrf.mxu0
    %v1386 = vadd.f32 %v967, %v1385
    %v1387 = vpop.f32.mrf.mxu0
    %v1388 = vadd.f32 %v967, %v1387
    %1389 = vmatmul.bf16.gmra.mxu0 %v925
    %v1390 = vpop.f32.mrf.mxu0
    %v1391 = vadd.f32 %v967, %v1390
    %v1392 = vpop.f32.mrf.mxu0
    %v1393 = vadd.f32 %v967, %v1392
    %1394 = vdwg.mxu0
    %1395 = vmatpush.bf16.msra.mxu0 %v1095
    %1396 = vmatpush.bf16.msra.mxu0 %v1093
    %1397 = vmatpush.bf16.msra.mxu0 %v1091
    %1398 = vmatpush.bf16.msra.mxu0 %v1089
    %1399 = vmatpush.bf16.msra.mxu0 %v1087
    %1400 = vmatpush.bf16.msra.mxu0 %v1085
    %1401 = vmatpush.bf16.msra.mxu0 %v1083
    %1402 = vmatpush.bf16.msra.mxu0 %v1081
    %1403 = vmatmul.bf16.gmra.mxu0 %v896
    %v1404 = vpop.f32.mrf.mxu0
    %v1405 = vadd.f32 %v1316, %v1404
    %v1406 = vpop.f32.mrf.mxu0
    %v1407 = vadd.f32 %v1318, %v1406
    %1408 = vmatmul.bf16.gmra.mxu0 %v898
    %v1409 = vpop.f32.mrf.mxu0
    %v1410 = vadd.f32 %v1321, %v1409
    %v1411 = vpop.f32.mrf.mxu0
    %v1412 = vadd.f32 %v1323, %v1411
    %1413 = vmatmul.bf16.gmra.mxu0 %v900
    %v1414 = vpop.f32.mrf.mxu0
    %v1415 = vadd.f32 %v1326, %v1414
    %v1416 = vpop.f32.mrf.mxu0
    %v1417 = vadd.f32 %v1328, %v1416
    %1418 = vmatmul.bf16.gmra.mxu0 %v902
    %v1419 = vpop.f32.mrf.mxu0
    %v1420 = vadd.f32 %v1331, %v1419
    %v1421 = vpop.f32.mrf.mxu0
    %v1422 = vadd.f32 %v1333, %v1421
    %1423 = vmatmul.bf16.gmra.mxu0 %v904
    %v1424 = vpop.f32.mrf.mxu0
    %v1425 = vadd.f32 %v1336, %v1424
    %v1426 = vpop.f32.mrf.mxu0
    %v1427 = vadd.f32 %v1338, %v1426
    %1428 = vmatmul.bf16.gmra.mxu0 %v906
    %v1429 = vpop.f32.mrf.mxu0
    %v1430 = vadd.f32 %v1341, %v1429
    %v1431 = vpop.f32.mrf.mxu0
    %v1432 = vadd.f32 %v1343, %v1431
    %1433 = vmatmul.bf16.gmra.mxu0 %v908
    %v1434 = vpop.f32.mrf.mxu0
    %v1435 = vadd.f32 %v1346, %v1434
    %v1436 = vpop.f32.mrf.mxu0
    %v1437 = vadd.f32 %v1348, %v1436
    %1438 = vmatmul.bf16.gmra.mxu0 %v910
    %v1439 = vpop.f32.mrf.mxu0
    %v1440 = vadd.f32 %v1351, %v1439
    %v1441 = vpop.f32.mrf.mxu0
    %v1442 = vadd.f32 %v1353, %v1441
    %1443 = vmatmul.bf16.gmra.mxu0 %v912
    %v1444 = vpop.f32.mrf.mxu0
    %v1445 = vadd.f32 %v1356, %v1444
    %v1446 = vpop.f32.mrf.mxu0
    %v1447 = vadd.f32 %v1358, %v1446
    %1448 = vmatmul.bf16.gmra.mxu0 %v914
    %v1449 = vpop.f32.mrf.mxu0
    %v1450 = vadd.f32 %v1361, %v1449
    %v1451 = vpop.f32.mrf.mxu0
    %v1452 = vadd.f32 %v1363, %v1451
    %1453 = vmatmul.bf16.gmra.mxu0 %v916
    %v1454 = vpop.f32.mrf.mxu0
    %v1455 = vadd.f32 %v1366, %v1454
    %v1456 = vpop.f32.mrf.mxu0
    %v1457 = vadd.f32 %v1368, %v1456
    %1458 = vmatmul.bf16.gmra.mxu0 %v918
    %v1459 = vpop.f32.mrf.mxu0
    %v1460 = vadd.f32 %v1371, %v1459
    %v1461 = vpop.f32.mrf.mxu0
    %v1462 = vadd.f32 %v1373, %v1461
    %1463 = vmatmul.bf16.gmra.mxu0 %v920
    %v1464 = vpop.f32.mrf.mxu0
    %v1465 = vadd.f32 %v1376, %v1464
    %v1466 = vpop.f32.mrf.mxu0
    %v1467 = vadd.f32 %v1378, %v1466
    %1468 = vmatmul.bf16.gmra.mxu0 %v922
    %v1469 = vpop.f32.mrf.mxu0
    %v1470 = vadd.f32 %v1381, %v1469
    %v1471 = vpop.f32.mrf.mxu0
    %v1472 = vadd.f32 %v1383, %v1471
    %1473 = vmatmul.bf16.gmra.mxu0 %v924
    %v1474 = vpop.f32.mrf.mxu0
    %v1475 = vadd.f32 %v1386, %v1474
    %v1476 = vpop.f32.mrf.mxu0
    %v1477 = vadd.f32 %v1388, %v1476
    %1478 = vmatmul.bf16.gmra.mxu0 %v926
    %v1479 = vpop.f32.mrf.mxu0
    %v1480 = vadd.f32 %v1391, %v1479
    %v1481 = vpop.f32.mrf.mxu0
    %v1482 = vadd.f32 %v1393, %v1481
    %1483 = vdwg.mxu0
    %v1484 = vpack.c.bf16 %v1405, %v1227
    %v1485 = vpack.c.bf16 %v1407, %v1229
    %v1486 = vpack.c.bf16 %v1410, %v1232
    %v1487 = vpack.c.bf16 %v1412, %v1234
    %v1488 = vpack.c.bf16 %v1415, %v1237
    %v1489 = vpack.c.bf16 %v1417, %v1239
    %v1490 = vpack.c.bf16 %v1420, %v1242
    %v1491 = vpack.c.bf16 %v1422, %v1244
    %v1492 = vpack.c.bf16 %v1425, %v1247
    %v1493 = vpack.c.bf16 %v1427, %v1249
    %v1494 = vpack.c.bf16 %v1430, %v1252
    %v1495 = vpack.c.bf16 %v1432, %v1254
    %v1496 = vpack.c.bf16 %v1435, %v1257
    %v1497 = vpack.c.bf16 %v1437, %v1259
    %v1498 = vpack.c.bf16 %v1440, %v1262
    %v1499 = vpack.c.bf16 %v1442, %v1264
    %v1500 = vpack.c.bf16 %v1445, %v1267
    %v1501 = vpack.c.bf16 %v1447, %v1269
    %v1502 = vpack.c.bf16 %v1450, %v1272
    %v1503 = vpack.c.bf16 %v1452, %v1274
    %v1504 = vpack.c.bf16 %v1455, %v1277
    %v1505 = vpack.c.bf16 %v1457, %v1279
    %v1506 = vpack.c.bf16 %v1460, %v1282
    %v1507 = vpack.c.bf16 %v1462, %v1284
    %v1508 = vpack.c.bf16 %v1465, %v1287
    %v1509 = vpack.c.bf16 %v1467, %v1289
    %v1510 = vpack.c.bf16 %v1470, %v1292
    %v1511 = vpack.c.bf16 %v1472, %v1294
    %v1512 = vpack.c.bf16 %v1475, %v1297
    %v1513 = vpack.c.bf16 %v1477, %v1299
    %v1514 = vpack.c.bf16 %v1480, %v1302
    %v1515 = vpack.c.bf16 %v1482, %v1304
    %1516 = vst [vmem:[#allocation10] sm:$0xff] %v1484
    %1517 = vst [vmem:[#allocation10 + $0x8] sm:$0xff] %v1485
    %1518 = vst [vmem:[#allocation10 + $0x10] sm:$0xff] %v1486
    %1519 = vst [vmem:[#allocation10 + $0x18] sm:$0xff] %v1487
    %1520 = vst [vmem:[#allocation10 + $0x20] sm:$0xff] %v1488
    %1521 = vst [vmem:[#allocation10 + $0x28] sm:$0xff] %v1489
    %1522 = vst [vmem:[#allocation10 + $0x30] sm:$0xff] %v1490
    %1523 = vst [vmem:[#allocation10 + $0x38] sm:$0xff] %v1491
    %1524 = vst [vmem:[#allocation10 + $0x40] sm:$0xff] %v1492
    %1525 = vst [vmem:[#allocation10 + $0x48] sm:$0xff] %v1493
    %1526 = vst [vmem:[#allocation10 + $0x50] sm:$0xff] %v1494
    %1527 = vst [vmem:[#allocation10 + $0x58] sm:$0xff] %v1495
    %1528 = vst [vmem:[#allocation10 + $0x60] sm:$0xff] %v1496
    %1529 = vst [vmem:[#allocation10 + $0x68] sm:$0xff] %v1497
    %1530 = vst [vmem:[#allocation10 + $0x70] sm:$0xff] %v1498
    %1531 = vst [vmem:[#allocation10 + $0x78] sm:$0xff] %v1499
    %1532 = vst [vmem:[#allocation10 + $0x80] sm:$0xff] %v1500
    %1533 = vst [vmem:[#allocation10 + $0x88] sm:$0xff] %v1501
    %1534 = vst [vmem:[#allocation10 + $0x90] sm:$0xff] %v1502
    %1535 = vst [vmem:[#allocation10 + $0x98] sm:$0xff] %v1503
    %1536 = vst [vmem:[#allocation10 + $0xa0] sm:$0xff] %v1504
    %1537 = vst [vmem:[#allocation10 + $0xa8] sm:$0xff] %v1505
    %1538 = vst [vmem:[#allocation10 + $0xb0] sm:$0xff] %v1506
    %1539 = vst [vmem:[#allocation10 + $0xb8] sm:$0xff] %v1507
    %1540 = vst [vmem:[#allocation10 + $0xc0] sm:$0xff] %v1508
    %1541 = vst [vmem:[#allocation10 + $0xc8] sm:$0xff] %v1509
    %1542 = vst [vmem:[#allocation10 + $0xd0] sm:$0xff] %v1510
    %1543 = vst [vmem:[#allocation10 + $0xd8] sm:$0xff] %v1511
    %1544 = vst [vmem:[#allocation10 + $0xe0] sm:$0xff] %v1512
    %1545 = vst [vmem:[#allocation10 + $0xe8] sm:$0xff] %v1513
    %1546 = vst [vmem:[#allocation10 + $0xf0] sm:$0xff] %v1514
    %1547 = vst [vmem:[#allocation10 + $0xf8] sm:$0xff] %v1515
    // Predicated region
    $region38: #{tpu_custom_call.1} parent=1 // pred_check
      _
    $region39: #{tpu_custom_call.1} parent=1 // pred_check_branch
      %1549 = sbr.rel (0) target = $region41
    $region40: #{tpu_custom_call.1} parent=1 // pred_region
      %1551 = vsyncadd [#allocation4], 0
      %s1552 = sshll.u32 [#allocation10], 4
      %s1553 = int_to_ptr.vmem [resolvable:$true] %s1552
      %s1554 = sshll.u32 %s5, 4
      %s1555 = int_to_ptr.hbm [resolvable:$true] %s1554
      %1560 = dma.vmem_to_hbm [thread:$0]  %s1553, 4096, %s1555, [#allocation4], 128, 128, 8
    $region41: #{tpu_custom_call.1} parent=1 // pred_fallthru
      _
    // Predicated region
    $region42: #{tpu_custom_call.1} parent=1 // pred_check
      _
    $region43: #{tpu_custom_call.1} parent=1 // pred_check_branch
      %1562 = sbr.rel (0) target = $region45
    $region44: #{tpu_custom_call.1} parent=1 // pred_region
      %1564 = dma.done [#allocation4], 4096
    $region45: #{tpu_custom_call.1} parent=1 // pred_fallthru
      _
    %1565 = vsyncpa [#allocation3], 1
    %1566 = vsyncpa [#allocation6], 1
    %1567 = vsyncpa [#allocation9], 1
    %1568 = vsyncpa [#allocation4], 1

// kernel: tpu_custom_call.1
$region0: #{tpu_custom_call.1}
  #allocation0 [shape = 'u32[]', space=smem, size = 0x4, offset = 0x4, fixed_abs, tag = 'smem constant byte address 0x4 - core index']
  #allocation1 [shape = 'u32[72,128]{1,0:T(1,128)}', space=vmem, size = 0x9000, scoped, tag = 'internal scratch']
  %s0 = inlined_call_operand.hbm [shape: bf16[256,256], index: 0, kind: input, shape index: {}]
  %s1 = inlined_call_operand.hbm [shape: bf16[256,256], index: 1, kind: input, shape index: {}]
  %s2 = inlined_call_operand.hbm [shape: bf16[1,256], index: 2, kind: input, shape index: {}]
  %s3 = inlined_call_operand.hbm [shape: bf16[256,256], index: 3, kind: input, shape index: {}]
  %s4 = inlined_call_operand.vmem [shape: bf16[1,256], index: 4, kind: input, shape index: {}]
  %s5 = inlined_call_operand.hbm [shape: bf16[256,256], index: 5, kind: output, shape index: {}]
  %s6 = sld [smem:[#allocation0]]
  $region46: #{tpu_custom_call.1} parent=0
    _
  %s8 = ssub.s32 1, %s6
  %s9 = scalar_select 0, %s8, %s6
  $region1: #{tpu_custom_call.1} parent=0
    #allocation2 [shape = 'u8[131072]{0}', space=vmem, size = 0x20000, scoped, tag = 'input window, operand 0, single buffered']
    #allocation3 [shape = 's32[1]{0}', space=sflag, size = 0x4, scoped, tag = 'scoped memory for tpu_custom_call.1']
    #allocation4 [shape = 's32[1]{0}', space=sflag, size = 0x4, scoped, tag = 'scoped memory for tpu_custom_call.1']
    #allocation5 [shape = 'u8[131072]{0}', space=vmem, size = 0x20000, scoped, tag = 'input window, operand 1, single buffered']
    #allocation6 [shape = 's32[1]{0}', space=sflag, size = 0x4, scoped, tag = 'scoped memory for tpu_custom_call.1']
    #allocation7 [shape = 'u8[1024]{0}', space=vmem, size = 0x400, scoped, tag = 'input window, operand 2, single buffered']
    #allocation8 [shape = 'u8[131072]{0}', space=vmem, size = 0x20000, scoped, tag = 'input window, operand 3, single buffered']
    #allocation9 [shape = 's32[1]{0}', space=sflag, size = 0x4, scoped, tag = 'scoped memory for tpu_custom_call.1']
    #allocation10 [shape = 'u8[131072]{0}', space=vmem, size = 0x20000, scoped, tag = 'output window, operand 0, single buffered']
    %10 = vsyncpa [#allocation3], 0
    %11 = vsyncpa [#allocation6], 0
    %12 = vsyncpa [#allocation9], 0
    %13 = vsyncpa [#allocation4], 0
    // Predicated region
    $region2: #{tpu_custom_call.1} parent=1 // pred_check
      _
    $region3: #{tpu_custom_call.1} parent=1 // pred_check_branch
      %15 = sbr.rel (0) target = $region5
    $region4: #{tpu_custom_call.1} parent=1 // pred_region
      %17 = vsyncadd [#allocation3], 0
      %s18 = sshll.u32 %s0, 4
      %s19 = int_to_ptr.hbm [resolvable:$true] %s18
      %s20 = sshll.u32 [#allocation2], 4
      %s21 = int_to_ptr.vmem [resolvable:$true] %s20
      %26 = dma.hbm_to_vmem [thread:$0]  %s19, 4096, %s21, [#allocation3], 128, 128, 8
    $region5: #{tpu_custom_call.1} parent=1 // pred_fallthru
      _
    // Predicated region
    $region6: #{tpu_custom_call.1} parent=1 // pred_check
      _
    $region7: #{tpu_custom_call.1} parent=1 // pred_check_branch
      %28 = sbr.rel (0) target = $region9
    $region8: #{tpu_custom_call.1} parent=1 // pred_region
      %30 = vsyncadd [#allocation6], 0
      %s31 = sshll.u32 %s1, 4
      %s32 = int_to_ptr.hbm [resolvable:$true] %s31
      %s33 = sshll.u32 [#allocation5], 4
      %s34 = int_to_ptr.vmem [resolvable:$true] %s33
      %39 = dma.hbm_to_vmem [thread:$0]  %s32, 4096, %s34, [#allocation6], 128, 128, 8
    $region9: #{tpu_custom_call.1} parent=1 // pred_fallthru
      _
    // Predicated region
    $region10: #{tpu_custom_call.1} parent=1 // pred_check
      _
    $region11: #{tpu_custom_call.1} parent=1 // pred_check_branch
      %41 = sbr.rel (0) target = $region13
    $region12: #{tpu_custom_call.1} parent=1 // pred_region
      %43 = vsyncadd [#allocation6], 0
      %s45 = sshll.u32 %s2, 4
      %s46 = int_to_ptr.hbm [resolvable:$true] %s45
      %s47 = sshll.u32 [#allocation7], 4
      %s48 = int_to_ptr.vmem [resolvable:$true] %s47
      %50 = dma.hbm_to_vmem [thread:$0]  %s46, 32, %s48, [#allocation6]
    $region13: #{tpu_custom_call.1} parent=1 // pred_fallthru
      _
    // Predicated region
    $region14: #{tpu_custom_call.1} parent=1 // pred_check
      _
    $region15: #{tpu_custom_call.1} parent=1 // pred_check_branch
      %52 = sbr.rel (0) target = $region17
    $region16: #{tpu_custom_call.1} parent=1 // pred_region
      %54 = vsyncadd [#allocation9], 0
      %s55 = sshll.u32 %s3, 4
      %s56 = int_to_ptr.hbm [resolvable:$true] %s55
      %s57 = sshll.u32 [#allocation8], 4
      %s58 = int_to_ptr.vmem [resolvable:$true] %s57
      %63 = dma.hbm_to_vmem [thread:$0]  %s56, 4096, %s58, [#allocation9], 128, 128, 8
    $region17: #{tpu_custom_call.1} parent=1 // pred_fallthru
      _
    // Predicated region
    $region18: #{tpu_custom_call.1} parent=1 // pred_check
      _
    $region19: #{tpu_custom_call.1} parent=1 // pred_check_branch
      %65 = sbr.rel (0) target = $region21
    $region20: #{tpu_custom_call.1} parent=1 // pred_region
      _
    $region21: #{tpu_custom_call.1} parent=1 // pred_fallthru
      _
    // Predicated region
    $region22: #{tpu_custom_call.1} parent=1 // pred_check
      _
    $region23: #{tpu_custom_call.1} parent=1 // pred_check_branch
      %67 = sbr.rel (0) target = $region25
    $region24: #{tpu_custom_call.1} parent=1 // pred_region
      %69 = dma.done [#allocation3], 4096
    $region25: #{tpu_custom_call.1} parent=1 // pred_fallthru
      _
    // Predicated region
    $region26: #{tpu_custom_call.1} parent=1 // pred_check
      _
    $region27: #{tpu_custom_call.1} parent=1 // pred_check_branch
      %71 = sbr.rel (0) target = $region29
    $region28: #{tpu_custom_call.1} parent=1 // pred_region
      %73 = dma.done [#allocation6], 4096
    $region29: #{tpu_custom_call.1} parent=1 // pred_fallthru
      _
    // Predicated region
    $region30: #{tpu_custom_call.1} parent=1 // pred_check
      _
    $region31: #{tpu_custom_call.1} parent=1 // pred_check_branch
      %75 = sbr.rel (0) target = $region33
    $region32: #{tpu_custom_call.1} parent=1 // pred_region
      %77 = dma.done [#allocation6], 32
    $region33: #{tpu_custom_call.1} parent=1 // pred_fallthru
      _
    // Predicated region
    $region34: #{tpu_custom_call.1} parent=1 // pred_check
      _
    $region35: #{tpu_custom_call.1} parent=1 // pred_check_branch
      %79 = sbr.rel (0) target = $region37
    $region36: #{tpu_custom_call.1} parent=1 // pred_region
      %81 = dma.done [#allocation9], 4096
    $region37: #{tpu_custom_call.1} parent=1 // pred_fallthru
      _
    %v82 = vld [vmem:[#allocation2] sm:$0xff]
    %v83 = vld [vmem:[#allocation2 + $0x8] sm:$0xff]
    %v84 = vld [vmem:[#allocation2 + $0x10] sm:$0xff]
    %v85 = vld [vmem:[#allocation2 + $0x18] sm:$0xff]
    %v86 = vld [vmem:[#allocation2 + $0x20] sm:$0xff]
    %v87 = vld [vmem:[#allocation2 + $0x28] sm:$0xff]
    %v88 = vld [vmem:[#allocation2 + $0x30] sm:$0xff]
    %v89 = vld [vmem:[#allocation2 + $0x38] sm:$0xff]
    %v90 = vld [vmem:[#allocation2 + $0x40] sm:$0xff]
    %v91 = vld [vmem:[#allocation2 + $0x48] sm:$0xff]
    %v92 = vld [vmem:[#allocation2 + $0x50] sm:$0xff]
    %v93 = vld [vmem:[#allocation2 + $0x58] sm:$0xff]
    %v94 = vld [vmem:[#allocation2 + $0x60] sm:$0xff]
    %v95 = vld [vmem:[#allocation2 + $0x68] sm:$0xff]
    %v96 = vld [vmem:[#allocation2 + $0x70] sm:$0xff]
    %v97 = vld [vmem:[#allocation2 + $0x78] sm:$0xff]
    %v98 = vld [vmem:[#allocation2 + $0x80] sm:$0xff]
    %v99 = vld [vmem:[#allocation2 + $0x88] sm:$0xff]
    %v100 = vld [vmem:[#allocation2 + $0x90] sm:$0xff]
    %v101 = vld [vmem:[#allocation2 + $0x98] sm:$0xff]
    %v102 = vld [vmem:[#allocation2 + $0xa0] sm:$0xff]
    %v103 = vld [vmem:[#allocation2 + $0xa8] sm:$0xff]
    %v104 = vld [vmem:[#allocation2 + $0xb0] sm:$0xff]
    %v105 = vld [vmem:[#allocation2 + $0xb8] sm:$0xff]
    %v106 = vld [vmem:[#allocation2 + $0xc0] sm:$0xff]
    %v107 = vld [vmem:[#allocation2 + $0xc8] sm:$0xff]
    %v108 = vld [vmem:[#allocation2 + $0xd0] sm:$0xff]
    %v109 = vld [vmem:[#allocation2 + $0xd8] sm:$0xff]
    %v110 = vld [vmem:[#allocation2 + $0xe0] sm:$0xff]
    %v111 = vld [vmem:[#allocation2 + $0xe8] sm:$0xff]
    %v112 = vld [vmem:[#allocation2 + $0xf0] sm:$0xff]
    %v113 = vld [vmem:[#allocation2 + $0xf8] sm:$0xff]
    %v114 = vld [vmem:[#allocation5] sm:$0xff]
    %v115 = vld [vmem:[#allocation5 + $0x8] sm:$0xff]
    %v116 = vld [vmem:[#allocation5 + $0x10] sm:$0xff]
    %v117 = vld [vmem:[#allocation5 + $0x18] sm:$0xff]
    %v118 = vld [vmem:[#allocation5 + $0x20] sm:$0xff]
    %v119 = vld [vmem:[#allocation5 + $0x28] sm:$0xff]
    %v120 = vld [vmem:[#allocation5 + $0x30] sm:$0xff]
    %v121 = vld [vmem:[#allocation5 + $0x38] sm:$0xff]
    %v122 = vld [vmem:[#allocation5 + $0x40] sm:$0xff]
    %v123 = vld [vmem:[#allocation5 + $0x48] sm:$0xff]
    %v124 = vld [vmem:[#allocation5 + $0x50] sm:$0xff]
    %v125 = vld [vmem:[#allocation5 + $0x58] sm:$0xff]
    %v126 = vld [vmem:[#allocation5 + $0x60] sm:$0xff]
    %v127 = vld [vmem:[#allocation5 + $0x68] sm:$0xff]
    %v128 = vld [vmem:[#allocation5 + $0x70] sm:$0xff]
    %v129 = vld [vmem:[#allocation5 + $0x78] sm:$0xff]
    %v130 = vld [vmem:[#allocation5 + $0x80] sm:$0xff]
    %v131 = vld [vmem:[#allocation5 + $0x88] sm:$0xff]
    %v132 = vld [vmem:[#allocation5 + $0x90] sm:$0xff]
    %v133 = vld [vmem:[#allocation5 + $0x98] sm:$0xff]
    %v134 = vld [vmem:[#allocation5 + $0xa0] sm:$0xff]
    %v135 = vld [vmem:[#allocation5 + $0xa8] sm:$0xff]
    %v136 = vld [vmem:[#allocation5 + $0xb0] sm:$0xff]
    %v137 = vld [vmem:[#allocation5 + $0xb8] sm:$0xff]
    %v138 = vld [vmem:[#allocation5 + $0xc0] sm:$0xff]
    %v139 = vld [vmem:[#allocation5 + $0xc8] sm:$0xff]
    %v140 = vld [vmem:[#allocation5 + $0xd0] sm:$0xff]
    %v141 = vld [vmem:[#allocation5 + $0xd8] sm:$0xff]
    %v142 = vld [vmem:[#allocation5 + $0xe0] sm:$0xff]
    %v143 = vld [vmem:[#allocation5 + $0xe8] sm:$0xff]
    %v144 = vld [vmem:[#allocation5 + $0xf0] sm:$0xff]
    %v145 = vld [vmem:[#allocation5 + $0xf8] sm:$0xff]
    %v146 = vld [vmem:[#allocation7] sm:$0x3]
    %v147 = vunpack.c.l.bf16 %v146
    %v149 = vperm.slane %v147, 0
    %v150 = vperm.slane %v147, 2
    %v153 = vperm.slane %v149, 0
    %v154 = vperm.slane %v150, 0
    %v187 = vunpack.c.l.b16 %v82
    %v188 = vunpack.c.h.b16 %v82
    %v189 = vunpack.c.l.b16 %v83
    %v190 = vunpack.c.h.b16 %v83
    %v191 = vunpack.c.l.b16 %v84
    %v192 = vunpack.c.h.b16 %v84
    %v193 = vunpack.c.l.b16 %v85
    %v194 = vunpack.c.h.b16 %v85
    %v195 = vunpack.c.l.b16 %v86
    %v196 = vunpack.c.h.b16 %v86
    %v197 = vunpack.c.l.b16 %v87
    %v198 = vunpack.c.h.b16 %v87
    %v199 = vunpack.c.l.b16 %v88
    %v200 = vunpack.c.h.b16 %v88
    %v201 = vunpack.c.l.b16 %v89
    %v202 = vunpack.c.h.b16 %v89
    %v203 = vunpack.c.l.b16 %v90
    %v204 = vunpack.c.h.b16 %v90
    %v205 = vunpack.c.l.b16 %v91
    %v206 = vunpack.c.h.b16 %v91
    %v207 = vunpack.c.l.b16 %v92
    %v208 = vunpack.c.h.b16 %v92
    %v209 = vunpack.c.l.b16 %v93
    %v210 = vunpack.c.h.b16 %v93
    %v211 = vunpack.c.l.b16 %v94
    %v212 = vunpack.c.h.b16 %v94
    %v213 = vunpack.c.l.b16 %v95
    %v214 = vunpack.c.h.b16 %v95
    %v215 = vunpack.c.l.b16 %v96
    %v216 = vunpack.c.h.b16 %v96
    %v217 = vunpack.c.l.b16 %v97
    %v218 = vunpack.c.h.b16 %v97
    %v219 = vunpack.c.l.b16 %v98
    %v220 = vunpack.c.h.b16 %v98
    %v221 = vunpack.c.l.b16 %v99
    %v222 = vunpack.c.h.b16 %v99
    %v223 = vunpack.c.l.b16 %v100
    %v224 = vunpack.c.h.b16 %v100
    %v225 = vunpack.c.l.b16 %v101
    %v226 = vunpack.c.h.b16 %v101
    %v227 = vunpack.c.l.b16 %v102
    %v228 = vunpack.c.h.b16 %v102
    %v229 = vunpack.c.l.b16 %v103
    %v230 = vunpack.c.h.b16 %v103
    %v231 = vunpack.c.l.b16 %v104
    %v232 = vunpack.c.h.b16 %v104
    %v233 = vunpack.c.l.b16 %v105
    %v234 = vunpack.c.h.b16 %v105
    %v235 = vunpack.c.l.b16 %v106
    %v236 = vunpack.c.h.b16 %v106
    %v237 = vunpack.c.l.b16 %v107
    %v238 = vunpack.c.h.b16 %v107
    %v239 = vunpack.c.l.b16 %v108
    %v240 = vunpack.c.h.b16 %v108
    %v241 = vunpack.c.l.b16 %v109
    %v242 = vunpack.c.h.b16 %v109
    %v243 = vunpack.c.l.b16 %v110
    %v244 = vunpack.c.h.b16 %v110
    %v245 = vunpack.c.l.b16 %v111
    %v246 = vunpack.c.h.b16 %v111
    %v247 = vunpack.c.l.b16 %v112
    %v248 = vunpack.c.h.b16 %v112
    %v249 = vunpack.c.l.b16 %v113
    %v250 = vunpack.c.h.b16 %v113
    %v251 = vpack.c.b16 %v189, %v187
    %v252 = vpack.c.b16 %v190, %v188
    %v253 = vpack.c.b16 %v193, %v191
    %v254 = vpack.c.b16 %v194, %v192
    %v255 = vpack.c.b16 %v197, %v195
    %v256 = vpack.c.b16 %v198, %v196
    %v257 = vpack.c.b16 %v201, %v199
    %v258 = vpack.c.b16 %v202, %v200
    %v259 = vpack.c.b16 %v205, %v203
    %v260 = vpack.c.b16 %v206, %v204
    %v261 = vpack.c.b16 %v209, %v207
    %v262 = vpack.c.b16 %v210, %v208
    %v263 = vpack.c.b16 %v213, %v211
    %v264 = vpack.c.b16 %v214, %v212
    %v265 = vpack.c.b16 %v217, %v215
    %v266 = vpack.c.b16 %v218, %v216
    %v267 = vpack.c.b16 %v221, %v219
    %v268 = vpack.c.b16 %v222, %v220
    %v269 = vpack.c.b16 %v225, %v223
    %v270 = vpack.c.b16 %v226, %v224
    %v271 = vpack.c.b16 %v229, %v227
    %v272 = vpack.c.b16 %v230, %v228
    %v273 = vpack.c.b16 %v233, %v231
    %v274 = vpack.c.b16 %v234, %v232
    %v275 = vpack.c.b16 %v237, %v235
    %v276 = vpack.c.b16 %v238, %v236
    %v277 = vpack.c.b16 %v241, %v239
    %v278 = vpack.c.b16 %v242, %v240
    %v279 = vpack.c.b16 %v245, %v243
    %v280 = vpack.c.b16 %v246, %v244
    %v281 = vpack.c.b16 %v249, %v247
    %v282 = vpack.c.b16 %v250, %v248
    %v347 = vunpack.c.l.b16 %v114
    %v348 = vunpack.c.h.b16 %v114
    %v349 = vunpack.c.l.b16 %v115
    %v350 = vunpack.c.h.b16 %v115
    %v351 = vunpack.c.l.b16 %v116
    %v352 = vunpack.c.h.b16 %v116
    %v353 = vunpack.c.l.b16 %v117
    %v354 = vunpack.c.h.b16 %v117
    %v355 = vunpack.c.l.b16 %v118
    %v356 = vunpack.c.h.b16 %v118
    %v357 = vunpack.c.l.b16 %v119
    %v358 = vunpack.c.h.b16 %v119
    %v359 = vunpack.c.l.b16 %v120
    %v360 = vunpack.c.h.b16 %v120
    %v361 = vunpack.c.l.b16 %v121
    %v362 = vunpack.c.h.b16 %v121
    %v363 = vunpack.c.l.b16 %v122
    %v364 = vunpack.c.h.b16 %v122
    %v365 = vunpack.c.l.b16 %v123
    %v366 = vunpack.c.h.b16 %v123
    %v367 = vunpack.c.l.b16 %v124
    %v368 = vunpack.c.h.b16 %v124
    %v369 = vunpack.c.l.b16 %v125
    %v370 = vunpack.c.h.b16 %v125
    %v371 = vunpack.c.l.b16 %v126
    %v372 = vunpack.c.h.b16 %v126
    %v373 = vunpack.c.l.b16 %v127
    %v374 = vunpack.c.h.b16 %v127
    %v375 = vunpack.c.l.b16 %v128
    %v376 = vunpack.c.h.b16 %v128
    %v377 = vunpack.c.l.b16 %v129
    %v378 = vunpack.c.h.b16 %v129
    %v379 = vunpack.c.l.b16 %v130
    %v380 = vunpack.c.h.b16 %v130
    %v381 = vunpack.c.l.b16 %v131
    %v382 = vunpack.c.h.b16 %v131
    %v383 = vunpack.c.l.b16 %v132
    %v384 = vunpack.c.h.b16 %v132
    %v385 = vunpack.c.l.b16 %v133
    %v386 = vunpack.c.h.b16 %v133
    %v387 = vunpack.c.l.b16 %v134
    %v388 = vunpack.c.h.b16 %v134
    %v389 = vunpack.c.l.b16 %v135
    %v390 = vunpack.c.h.b16 %v135
    %v391 = vunpack.c.l.b16 %v136
    %v392 = vunpack.c.h.b16 %v136
    %v393 = vunpack.c.l.b16 %v137
    %v394 = vunpack.c.h.b16 %v137
    %v395 = vunpack.c.l.b16 %v138
    %v396 = vunpack.c.h.b16 %v138
    %v397 = vunpack.c.l.b16 %v139
    %v398 = vunpack.c.h.b16 %v139
    %v399 = vunpack.c.l.b16 %v140
    %v400 = vunpack.c.h.b16 %v140
    %v401 = vunpack.c.l.b16 %v141
    %v402 = vunpack.c.h.b16 %v141
    %v403 = vunpack.c.l.b16 %v142
    %v404 = vunpack.c.h.b16 %v142
    %v405 = vunpack.c.l.b16 %v143
    %v406 = vunpack.c.h.b16 %v143
    %v407 = vunpack.c.l.b16 %v144
    %v408 = vunpack.c.h.b16 %v144
    %v409 = vunpack.c.l.b16 %v145
    %v410 = vunpack.c.h.b16 %v145
    %v411 = vpack.c.b16 %v349, %v347
    %v412 = vpack.c.b16 %v350, %v348
    %v413 = vpack.c.b16 %v353, %v351
    %v414 = vpack.c.b16 %v354, %v352
    %v415 = vpack.c.b16 %v357, %v355
    %v416 = vpack.c.b16 %v358, %v356
    %v417 = vpack.c.b16 %v361, %v359
    %v418 = vpack.c.b16 %v362, %v360
    %v419 = vpack.c.b16 %v365, %v363
    %v420 = vpack.c.b16 %v366, %v364
    %v421 = vpack.c.b16 %v369, %v367
    %v422 = vpack.c.b16 %v370, %v368
    %v423 = vpack.c.b16 %v373, %v371
    %v424 = vpack.c.b16 %v374, %v372
    %v425 = vpack.c.b16 %v377, %v375
    %v426 = vpack.c.b16 %v378, %v376
    %v427 = vpack.c.b16 %v381, %v379
    %v428 = vpack.c.b16 %v382, %v380
    %v429 = vpack.c.b16 %v385, %v383
    %v430 = vpack.c.b16 %v386, %v384
    %v431 = vpack.c.b16 %v389, %v387
    %v432 = vpack.c.b16 %v390, %v388
    %v433 = vpack.c.b16 %v393, %v391
    %v434 = vpack.c.b16 %v394, %v392
    %v435 = vpack.c.b16 %v397, %v395
    %v436 = vpack.c.b16 %v398, %v396
    %v437 = vpack.c.b16 %v401, %v399
    %v438 = vpack.c.b16 %v402, %v400
    %v439 = vpack.c.b16 %v405, %v403
    %v440 = vpack.c.b16 %v406, %v404
    %v441 = vpack.c.b16 %v409, %v407
    %v442 = vpack.c.b16 %v410, %v408
    %475 = vmatpush.bf16.msra.mxu0 %v425
    %476 = vmatpush.bf16.msra.mxu0 %v423
    %477 = vmatpush.bf16.msra.mxu0 %v421
    %478 = vmatpush.bf16.msra.mxu0 %v419
    %479 = vmatpush.bf16.msra.mxu0 %v417
    %480 = vmatpush.bf16.msra.mxu0 %v415
    %481 = vmatpush.bf16.msra.mxu0 %v413
    %482 = vmatpush.bf16.msra.mxu0 %v411
    %483 = vmatmul.bf16.gmra.mxu0 %v251
    %v484 = vpop.f32.mrf.mxu0
    %v485 = vadd.f32 %v153, %v484
    %v486 = vpop.f32.mrf.mxu0
    %v487 = vadd.f32 %v153, %v486
    %488 = vmatmul.bf16.gmra.mxu0 %v253
    %v489 = vpop.f32.mrf.mxu0
    %v490 = vadd.f32 %v153, %v489
    %v491 = vpop.f32.mrf.mxu0
    %v492 = vadd.f32 %v153, %v491
    %493 = vmatmul.bf16.gmra.mxu0 %v255
    %v494 = vpop.f32.mrf.mxu0
    %v495 = vadd.f32 %v153, %v494
    %v496 = vpop.f32.mrf.mxu0
    %v497 = vadd.f32 %v153, %v496
    %498 = vmatmul.bf16.gmra.mxu0 %v257
    %v499 = vpop.f32.mrf.mxu0
    %v500 = vadd.f32 %v153, %v499
    %v501 = vpop.f32.mrf.mxu0
    %v502 = vadd.f32 %v153, %v501
    %503 = vmatmul.bf16.gmra.mxu0 %v259
    %v504 = vpop.f32.mrf.mxu0
    %v505 = vadd.f32 %v153, %v504
    %v506 = vpop.f32.mrf.mxu0
    %v507 = vadd.f32 %v153, %v506
    %508 = vmatmul.bf16.gmra.mxu0 %v261
    %v509 = vpop.f32.mrf.mxu0
    %v510 = vadd.f32 %v153, %v509
    %v511 = vpop.f32.mrf.mxu0
    %v512 = vadd.f32 %v153, %v511
    %513 = vmatmul.bf16.gmra.mxu0 %v263
    %v514 = vpop.f32.mrf.mxu0
    %v515 = vadd.f32 %v153, %v514
    %v516 = vpop.f32.mrf.mxu0
    %v517 = vadd.f32 %v153, %v516
    %518 = vmatmul.bf16.gmra.mxu0 %v265
    %v519 = vpop.f32.mrf.mxu0
    %v520 = vadd.f32 %v153, %v519
    %v521 = vpop.f32.mrf.mxu0
    %v522 = vadd.f32 %v153, %v521
    %523 = vmatmul.bf16.gmra.mxu0 %v267
    %v524 = vpop.f32.mrf.mxu0
    %v525 = vadd.f32 %v153, %v524
    %v526 = vpop.f32.mrf.mxu0
    %v527 = vadd.f32 %v153, %v526
    %528 = vmatmul.bf16.gmra.mxu0 %v269
    %v529 = vpop.f32.mrf.mxu0
    %v530 = vadd.f32 %v153, %v529
    %v531 = vpop.f32.mrf.mxu0
    %v532 = vadd.f32 %v153, %v531
    %533 = vmatmul.bf16.gmra.mxu0 %v271
    %v534 = vpop.f32.mrf.mxu0
    %v535 = vadd.f32 %v153, %v534
    %v536 = vpop.f32.mrf.mxu0
    %v537 = vadd.f32 %v153, %v536
    %538 = vmatmul.bf16.gmra.mxu0 %v273
    %v539 = vpop.f32.mrf.mxu0
    %v540 = vadd.f32 %v153, %v539
    %v541 = vpop.f32.mrf.mxu0
    %v542 = vadd.f32 %v153, %v541
    %543 = vmatmul.bf16.gmra.mxu0 %v275
    %v544 = vpop.f32.mrf.mxu0
    %v545 = vadd.f32 %v153, %v544
    %v546 = vpop.f32.mrf.mxu0
    %v547 = vadd.f32 %v153, %v546
    %548 = vmatmul.bf16.gmra.mxu0 %v277
    %v549 = vpop.f32.mrf.mxu0
    %v550 = vadd.f32 %v153, %v549
    %v551 = vpop.f32.mrf.mxu0
    %v552 = vadd.f32 %v153, %v551
    %553 = vmatmul.bf16.gmra.mxu0 %v279
    %v554 = vpop.f32.mrf.mxu0
    %v555 = vadd.f32 %v153, %v554
    %v556 = vpop.f32.mrf.mxu0
    %v557 = vadd.f32 %v153, %v556
    %558 = vmatmul.bf16.gmra.mxu0 %v281
    %v559 = vpop.f32.mrf.mxu0
    %v560 = vadd.f32 %v153, %v559
    %v561 = vpop.f32.mrf.mxu0
    %v562 = vadd.f32 %v153, %v561
    %563 = vdwg.mxu0
    %564 = vmatpush.bf16.msra.mxu0 %v441
    %565 = vmatpush.bf16.msra.mxu0 %v439
    %566 = vmatpush.bf16.msra.mxu0 %v437
    %567 = vmatpush.bf16.msra.mxu0 %v435
    %568 = vmatpush.bf16.msra.mxu0 %v433
    %569 = vmatpush.bf16.msra.mxu0 %v431
    %570 = vmatpush.bf16.msra.mxu0 %v429
    %571 = vmatpush.bf16.msra.mxu0 %v427
    %572 = vmatmul.bf16.gmra.mxu0 %v252
    %v573 = vpop.f32.mrf.mxu0
    %v574 = vadd.f32 %v485, %v573
    %v575 = vpop.f32.mrf.mxu0
    %v576 = vadd.f32 %v487, %v575
    %577 = vmatmul.bf16.gmra.mxu0 %v254
    %v578 = vpop.f32.mrf.mxu0
    %v579 = vadd.f32 %v490, %v578
    %v580 = vpop.f32.mrf.mxu0
    %v581 = vadd.f32 %v492, %v580
    %582 = vmatmul.bf16.gmra.mxu0 %v256
    %v583 = vpop.f32.mrf.mxu0
    %v584 = vadd.f32 %v495, %v583
    %v585 = vpop.f32.mrf.mxu0
    %v586 = vadd.f32 %v497, %v585
    %587 = vmatmul.bf16.gmra.mxu0 %v258
    %v588 = vpop.f32.mrf.mxu0
    %v589 = vadd.f32 %v500, %v588
    %v590 = vpop.f32.mrf.mxu0
    %v591 = vadd.f32 %v502, %v590
    %592 = vmatmul.bf16.gmra.mxu0 %v260
    %v593 = vpop.f32.mrf.mxu0
    %v594 = vadd.f32 %v505, %v593
    %v595 = vpop.f32.mrf.mxu0
    %v596 = vadd.f32 %v507, %v595
    %597 = vmatmul.bf16.gmra.mxu0 %v262
    %v598 = vpop.f32.mrf.mxu0
    %v599 = vadd.f32 %v510, %v598
    %v600 = vpop.f32.mrf.mxu0
    %v601 = vadd.f32 %v512, %v600
    %602 = vmatmul.bf16.gmra.mxu0 %v264
    %v603 = vpop.f32.mrf.mxu0
    %v604 = vadd.f32 %v515, %v603
    %v605 = vpop.f32.mrf.mxu0
    %v606 = vadd.f32 %v517, %v605
    %607 = vmatmul.bf16.gmra.mxu0 %v266
    %v608 = vpop.f32.mrf.mxu0
    %v609 = vadd.f32 %v520, %v608
    %v610 = vpop.f32.mrf.mxu0
    %v611 = vadd.f32 %v522, %v610
    %612 = vmatmul.bf16.gmra.mxu0 %v268
    %v613 = vpop.f32.mrf.mxu0
    %v614 = vadd.f32 %v525, %v613
    %v615 = vpop.f32.mrf.mxu0
    %v616 = vadd.f32 %v527, %v615
    %617 = vmatmul.bf16.gmra.mxu0 %v270
    %v618 = vpop.f32.mrf.mxu0
    %v619 = vadd.f32 %v530, %v618
    %v620 = vpop.f32.mrf.mxu0
    %v621 = vadd.f32 %v532, %v620
    %622 = vmatmul.bf16.gmra.mxu0 %v272
    %v623 = vpop.f32.mrf.mxu0
    %v624 = vadd.f32 %v535, %v623
    %v625 = vpop.f32.mrf.mxu0
    %v626 = vadd.f32 %v537, %v625
    %627 = vmatmul.bf16.gmra.mxu0 %v274
    %v628 = vpop.f32.mrf.mxu0
    %v629 = vadd.f32 %v540, %v628
    %v630 = vpop.f32.mrf.mxu0
    %v631 = vadd.f32 %v542, %v630
    %632 = vmatmul.bf16.gmra.mxu0 %v276
    %v633 = vpop.f32.mrf.mxu0
    %v634 = vadd.f32 %v545, %v633
    %v635 = vpop.f32.mrf.mxu0
    %v636 = vadd.f32 %v547, %v635
    %637 = vmatmul.bf16.gmra.mxu0 %v278
    %v638 = vpop.f32.mrf.mxu0
    %v639 = vadd.f32 %v550, %v638
    %v640 = vpop.f32.mrf.mxu0
    %v641 = vadd.f32 %v552, %v640
    %642 = vmatmul.bf16.gmra.mxu0 %v280
    %v643 = vpop.f32.mrf.mxu0
    %v644 = vadd.f32 %v555, %v643
    %v645 = vpop.f32.mrf.mxu0
    %v646 = vadd.f32 %v557, %v645
    %647 = vmatmul.bf16.gmra.mxu0 %v282
    %v648 = vpop.f32.mrf.mxu0
    %v649 = vadd.f32 %v560, %v648
    %v650 = vpop.f32.mrf.mxu0
    %v651 = vadd.f32 %v562, %v650
    %652 = vdwg.mxu0
    %653 = vmatpush.bf16.msra.mxu0 %v426
    %654 = vmatpush.bf16.msra.mxu0 %v424
    %655 = vmatpush.bf16.msra.mxu0 %v422
    %656 = vmatpush.bf16.msra.mxu0 %v420
    %657 = vmatpush.bf16.msra.mxu0 %v418
    %658 = vmatpush.bf16.msra.mxu0 %v416
    %659 = vmatpush.bf16.msra.mxu0 %v414
    %660 = vmatpush.bf16.msra.mxu0 %v412
    %661 = vmatmul.bf16.gmra.mxu0 %v251
    %v662 = vpop.f32.mrf.mxu0
    %v663 = vadd.f32 %v154, %v662
    %v664 = vpop.f32.mrf.mxu0
    %v665 = vadd.f32 %v154, %v664
    %666 = vmatmul.bf16.gmra.mxu0 %v253
    %v667 = vpop.f32.mrf.mxu0
    %v668 = vadd.f32 %v154, %v667
    %v669 = vpop.f32.mrf.mxu0
    %v670 = vadd.f32 %v154, %v669
    %671 = vmatmul.bf16.gmra.mxu0 %v255
    %v672 = vpop.f32.mrf.mxu0
    %v673 = vadd.f32 %v154, %v672
    %v674 = vpop.f32.mrf.mxu0
    %v675 = vadd.f32 %v154, %v674
    %676 = vmatmul.bf16.gmra.mxu0 %v257
    %v677 = vpop.f32.mrf.mxu0
    %v678 = vadd.f32 %v154, %v677
    %v679 = vpop.f32.mrf.mxu0
    %v680 = vadd.f32 %v154, %v679
    %681 = vmatmul.bf16.gmra.mxu0 %v259
    %v682 = vpop.f32.mrf.mxu0
    %v683 = vadd.f32 %v154, %v682
    %v684 = vpop.f32.mrf.mxu0
    %v685 = vadd.f32 %v154, %v684
    %686 = vmatmul.bf16.gmra.mxu0 %v261
    %v687 = vpop.f32.mrf.mxu0
    %v688 = vadd.f32 %v154, %v687
    %v689 = vpop.f32.mrf.mxu0
    %v690 = vadd.f32 %v154, %v689
    %691 = vmatmul.bf16.gmra.mxu0 %v263
    %v692 = vpop.f32.mrf.mxu0
    %v693 = vadd.f32 %v154, %v692
    %v694 = vpop.f32.mrf.mxu0
    %v695 = vadd.f32 %v154, %v694
    %696 = vmatmul.bf16.gmra.mxu0 %v265
    %v697 = vpop.f32.mrf.mxu0
    %v698 = vadd.f32 %v154, %v697
    %v699 = vpop.f32.mrf.mxu0
    %v700 = vadd.f32 %v154, %v699
    %701 = vmatmul.bf16.gmra.mxu0 %v267
    %v702 = vpop.f32.mrf.mxu0
    %v703 = vadd.f32 %v154, %v702
    %v704 = vpop.f32.mrf.mxu0
    %v705 = vadd.f32 %v154, %v704
    %706 = vmatmul.bf16.gmra.mxu0 %v269
    %v707 = vpop.f32.mrf.mxu0
    %v708 = vadd.f32 %v154, %v707
    %v709 = vpop.f32.mrf.mxu0
    %v710 = vadd.f32 %v154, %v709
    %711 = vmatmul.bf16.gmra.mxu0 %v271
    %v712 = vpop.f32.mrf.mxu0
    %v713 = vadd.f32 %v154, %v712
    %v714 = vpop.f32.mrf.mxu0
    %v715 = vadd.f32 %v154, %v714
    %716 = vmatmul.bf16.gmra.mxu0 %v273
    %v717 = vpop.f32.mrf.mxu0
    %v718 = vadd.f32 %v154, %v717
    %v719 = vpop.f32.mrf.mxu0
    %v720 = vadd.f32 %v154, %v719
    %721 = vmatmul.bf16.gmra.mxu0 %v275
    %v722 = vpop.f32.mrf.mxu0
    %v723 = vadd.f32 %v154, %v722
    %v724 = vpop.f32.mrf.mxu0
    %v725 = vadd.f32 %v154, %v724
    %726 = vmatmul.bf16.gmra.mxu0 %v277
    %v727 = vpop.f32.mrf.mxu0
    %v728 = vadd.f32 %v154, %v727
    %v729 = vpop.f32.mrf.mxu0
    %v730 = vadd.f32 %v154, %v729
    %731 = vmatmul.bf16.gmra.mxu0 %v279
    %v732 = vpop.f32.mrf.mxu0
    %v733 = vadd.f32 %v154, %v732
    %v734 = vpop.f32.mrf.mxu0
    %v735 = vadd.f32 %v154, %v734
    %736 = vmatmul.bf16.gmra.mxu0 %v281
    %v737 = vpop.f32.mrf.mxu0
    %v738 = vadd.f32 %v154, %v737
    %v739 = vpop.f32.mrf.mxu0
    %v740 = vadd.f32 %v154, %v739
    %741 = vdwg.mxu0
    %742 = vmatpush.bf16.msra.mxu0 %v442
    %743 = vmatpush.bf16.msra.mxu0 %v440
    %744 = vmatpush.bf16.msra.mxu0 %v438
    %745 = vmatpush.bf16.msra.mxu0 %v436
    %746 = vmatpush.bf16.msra.mxu0 %v434
    %747 = vmatpush.bf16.msra.mxu0 %v432
    %748 = vmatpush.bf16.msra.mxu0 %v430
    %749 = vmatpush.bf16.msra.mxu0 %v428
    %750 = vmatmul.bf16.gmra.mxu0 %v252
    %v751 = vpop.f32.mrf.mxu0
    %v752 = vadd.f32 %v663, %v751
    %v753 = vpop.f32.mrf.mxu0
    %v754 = vadd.f32 %v665, %v753
    %755 = vmatmul.bf16.gmra.mxu0 %v254
    %v756 = vpop.f32.mrf.mxu0
    %v757 = vadd.f32 %v668, %v756
    %v758 = vpop.f32.mrf.mxu0
    %v759 = vadd.f32 %v670, %v758
    %760 = vmatmul.bf16.gmra.mxu0 %v256
    %v761 = vpop.f32.mrf.mxu0
    %v762 = vadd.f32 %v673, %v761
    %v763 = vpop.f32.mrf.mxu0
    %v764 = vadd.f32 %v675, %v763
    %765 = vmatmul.bf16.gmra.mxu0 %v258
    %v766 = vpop.f32.mrf.mxu0
    %v767 = vadd.f32 %v678, %v766
    %v768 = vpop.f32.mrf.mxu0
    %v769 = vadd.f32 %v680, %v768
    %770 = vmatmul.bf16.gmra.mxu0 %v260
    %v771 = vpop.f32.mrf.mxu0
    %v772 = vadd.f32 %v683, %v771
    %v773 = vpop.f32.mrf.mxu0
    %v774 = vadd.f32 %v685, %v773
    %775 = vmatmul.bf16.gmra.mxu0 %v262
    %v776 = vpop.f32.mrf.mxu0
    %v777 = vadd.f32 %v688, %v776
    %v778 = vpop.f32.mrf.mxu0
    %v779 = vadd.f32 %v690, %v778
    %780 = vmatmul.bf16.gmra.mxu0 %v264
    %v781 = vpop.f32.mrf.mxu0
    %v782 = vadd.f32 %v693, %v781
    %v783 = vpop.f32.mrf.mxu0
    %v784 = vadd.f32 %v695, %v783
    %785 = vmatmul.bf16.gmra.mxu0 %v266
    %v786 = vpop.f32.mrf.mxu0
    %v787 = vadd.f32 %v698, %v786
    %v788 = vpop.f32.mrf.mxu0
    %v789 = vadd.f32 %v700, %v788
    %790 = vmatmul.bf16.gmra.mxu0 %v268
    %v791 = vpop.f32.mrf.mxu0
    %v792 = vadd.f32 %v703, %v791
    %v793 = vpop.f32.mrf.mxu0
    %v794 = vadd.f32 %v705, %v793
    %795 = vmatmul.bf16.gmra.mxu0 %v270
    %v796 = vpop.f32.mrf.mxu0
    %v797 = vadd.f32 %v708, %v796
    %v798 = vpop.f32.mrf.mxu0
    %v799 = vadd.f32 %v710, %v798
    %800 = vmatmul.bf16.gmra.mxu0 %v272
    %v801 = vpop.f32.mrf.mxu0
    %v802 = vadd.f32 %v713, %v801
    %v803 = vpop.f32.mrf.mxu0
    %v804 = vadd.f32 %v715, %v803
    %805 = vmatmul.bf16.gmra.mxu0 %v274
    %v806 = vpop.f32.mrf.mxu0
    %v807 = vadd.f32 %v718, %v806
    %v808 = vpop.f32.mrf.mxu0
    %v809 = vadd.f32 %v720, %v808
    %810 = vmatmul.bf16.gmra.mxu0 %v276
    %v811 = vpop.f32.mrf.mxu0
    %v812 = vadd.f32 %v723, %v811
    %v813 = vpop.f32.mrf.mxu0
    %v814 = vadd.f32 %v725, %v813
    %815 = vmatmul.bf16.gmra.mxu0 %v278
    %v816 = vpop.f32.mrf.mxu0
    %v817 = vadd.f32 %v728, %v816
    %v818 = vpop.f32.mrf.mxu0
    %v819 = vadd.f32 %v730, %v818
    %820 = vmatmul.bf16.gmra.mxu0 %v280
    %v821 = vpop.f32.mrf.mxu0
    %v822 = vadd.f32 %v733, %v821
    %v823 = vpop.f32.mrf.mxu0
    %v824 = vadd.f32 %v735, %v823
    %825 = vmatmul.bf16.gmra.mxu0 %v282
    %v826 = vpop.f32.mrf.mxu0
    %v827 = vadd.f32 %v738, %v826
    %v828 = vpop.f32.mrf.mxu0
    %v829 = vadd.f32 %v740, %v828
    %830 = vdwg.mxu0
    %v831 = vmax.f32 %v574, 0.0
    %v832 = vmax.f32 %v752, 0.0
    %v833 = vmax.f32 %v576, 0.0
    %v834 = vmax.f32 %v754, 0.0
    %v835 = vmax.f32 %v579, 0.0
    %v836 = vmax.f32 %v757, 0.0
    %v837 = vmax.f32 %v581, 0.0
    %v838 = vmax.f32 %v759, 0.0
    %v839 = vmax.f32 %v584, 0.0
    %v840 = vmax.f32 %v762, 0.0
    %v841 = vmax.f32 %v586, 0.0
    %v842 = vmax.f32 %v764, 0.0
    %v843 = vmax.f32 %v589, 0.0
    %v844 = vmax.f32 %v767, 0.0
    %v845 = vmax.f32 %v591, 0.0
    %v846 = vmax.f32 %v769, 0.0
    %v847 = vmax.f32 %v594, 0.0
    %v848 = vmax.f32 %v772, 0.0
    %v849 = vmax.f32 %v596, 0.0
    %v850 = vmax.f32 %v774, 0.0
    %v851 = vmax.f32 %v599, 0.0
    %v852 = vmax.f32 %v777, 0.0
    %v853 = vmax.f32 %v601, 0.0
    %v854 = vmax.f32 %v779, 0.0
    %v855 = vmax.f32 %v604, 0.0
    %v856 = vmax.f32 %v782, 0.0
    %v857 = vmax.f32 %v606, 0.0
    %v858 = vmax.f32 %v784, 0.0
    %v859 = vmax.f32 %v609, 0.0
    %v860 = vmax.f32 %v787, 0.0
    %v861 = vmax.f32 %v611, 0.0
    %v862 = vmax.f32 %v789, 0.0
    %v863 = vmax.f32 %v614, 0.0
    %v864 = vmax.f32 %v792, 0.0
    %v865 = vmax.f32 %v616, 0.0
    %v866 = vmax.f32 %v794, 0.0
    %v867 = vmax.f32 %v619, 0.0
    %v868 = vmax.f32 %v797, 0.0
    %v869 = vmax.f32 %v621, 0.0
    %v870 = vmax.f32 %v799, 0.0
    %v871 = vmax.f32 %v624, 0.0
    %v872 = vmax.f32 %v802, 0.0
    %v873 = vmax.f32 %v626, 0.0
    %v874 = vmax.f32 %v804, 0.0
    %v875 = vmax.f32 %v629, 0.0
    %v876 = vmax.f32 %v807, 0.0
    %v877 = vmax.f32 %v631, 0.0
    %v878 = vmax.f32 %v809, 0.0
    %v879 = vmax.f32 %v634, 0.0
    %v880 = vmax.f32 %v812, 0.0
    %v881 = vmax.f32 %v636, 0.0
    %v882 = vmax.f32 %v814, 0.0
    %v883 = vmax.f32 %v639, 0.0
    %v884 = vmax.f32 %v817, 0.0
    %v885 = vmax.f32 %v641, 0.0
    %v886 = vmax.f32 %v819, 0.0
    %v887 = vmax.f32 %v644, 0.0
    %v888 = vmax.f32 %v822, 0.0
    %v889 = vmax.f32 %v646, 0.0
    %v890 = vmax.f32 %v824, 0.0
    %v891 = vmax.f32 %v649, 0.0
    %v892 = vmax.f32 %v827, 0.0
    %v893 = vmax.f32 %v651, 0.0
    %v894 = vmax.f32 %v829, 0.0
    %v895 = vpack.c.bf16 %v833, %v831
    %v896 = vpack.c.bf16 %v834, %v832
    %v897 = vpack.c.bf16 %v837, %v835
    %v898 = vpack.c.bf16 %v838, %v836
    %v899 = vpack.c.bf16 %v841, %v839
    %v900 = vpack.c.bf16 %v842, %v840
    %v901 = vpack.c.bf16 %v845, %v843
    %v902 = vpack.c.bf16 %v846, %v844
    %v903 = vpack.c.bf16 %v849, %v847
    %v904 = vpack.c.bf16 %v850, %v848
    %v905 = vpack.c.bf16 %v853, %v851
    %v906 = vpack.c.bf16 %v854, %v852
    %v907 = vpack.c.bf16 %v857, %v855
    %v908 = vpack.c.bf16 %v858, %v856
    %v909 = vpack.c.bf16 %v861, %v859
    %v910 = vpack.c.bf16 %v862, %v860
    %v911 = vpack.c.bf16 %v865, %v863
    %v912 = vpack.c.bf16 %v866, %v864
    %v913 = vpack.c.bf16 %v869, %v867
    %v914 = vpack.c.bf16 %v870, %v868
    %v915 = vpack.c.bf16 %v873, %v871
    %v916 = vpack.c.bf16 %v874, %v872
    %v917 = vpack.c.bf16 %v877, %v875
    %v918 = vpack.c.bf16 %v878, %v876
    %v919 = vpack.c.bf16 %v881, %v879
    %v920 = vpack.c.bf16 %v882, %v880
    %v921 = vpack.c.bf16 %v885, %v883
    %v922 = vpack.c.bf16 %v886, %v884
    %v923 = vpack.c.bf16 %v889, %v887
    %v924 = vpack.c.bf16 %v890, %v888
    %v925 = vpack.c.bf16 %v893, %v891
    %v926 = vpack.c.bf16 %v894, %v892
    %v927 = vld [vmem:[#allocation8] sm:$0xff]
    %v928 = vld [vmem:[#allocation8 + $0x8] sm:$0xff]
    %v929 = vld [vmem:[#allocation8 + $0x10] sm:$0xff]
    %v930 = vld [vmem:[#allocation8 + $0x18] sm:$0xff]
    %v931 = vld [vmem:[#allocation8 + $0x20] sm:$0xff]
    %v932 = vld [vmem:[#allocation8 + $0x28] sm:$0xff]
    %v933 = vld [vmem:[#allocation8 + $0x30] sm:$0xff]
    %v934 = vld [vmem:[#allocation8 + $0x38] sm:$0xff]
    %v935 = vld [vmem:[#allocation8 + $0x40] sm:$0xff]
    %v936 = vld [vmem:[#allocation8 + $0x48] sm:$0xff]
    %v937 = vld [vmem:[#allocation8 + $0x50] sm:$0xff]
    %v938 = vld [vmem:[#allocation8 + $0x58] sm:$0xff]
    %v939 = vld [vmem:[#allocation8 + $0x60] sm:$0xff]
    %v940 = vld [vmem:[#allocation8 + $0x68] sm:$0xff]
    %v941 = vld [vmem:[#allocation8 + $0x70] sm:$0xff]
    %v942 = vld [vmem:[#allocation8 + $0x78] sm:$0xff]
    %v943 = vld [vmem:[#allocation8 + $0x80] sm:$0xff]
    %v944 = vld [vmem:[#allocation8 + $0x88] sm:$0xff]
    %v945 = vld [vmem:[#allocation8 + $0x90] sm:$0xff]
    %v946 = vld [vmem:[#allocation8 + $0x98] sm:$0xff]
    %v947 = vld [vmem:[#allocation8 + $0xa0] sm:$0xff]
    %v948 = vld [vmem:[#allocation8 + $0xa8] sm:$0xff]
    %v949 = vld [vmem:[#allocation8 + $0xb0] sm:$0xff]
    %v950 = vld [vmem:[#allocation8 + $0xb8] sm:$0xff]
    %v951 = vld [vmem:[#allocation8 + $0xc0] sm:$0xff]
    %v952 = vld [vmem:[#allocation8 + $0xc8] sm:$0xff]
    %v953 = vld [vmem:[#allocation8 + $0xd0] sm:$0xff]
    %v954 = vld [vmem:[#allocation8 + $0xd8] sm:$0xff]
    %v955 = vld [vmem:[#allocation8 + $0xe0] sm:$0xff]
    %v956 = vld [vmem:[#allocation8 + $0xe8] sm:$0xff]
    %v957 = vld [vmem:[#allocation8 + $0xf0] sm:$0xff]
    %v958 = vld [vmem:[#allocation8 + $0xf8] sm:$0xff]
    %v959 = vld [vmem:[%s4] sm:$0x3]
    %v960 = vunpack.c.l.bf16 %v959
    %v962 = vperm.slane %v960, 0
    %v963 = vperm.slane %v960, 2
    %v966 = vperm.slane %v962, 0
    %v967 = vperm.slane %v963, 0
    %v1000 = vunpack.c.l.b16 %v927
    %v1001 = vunpack.c.h.b16 %v927
    %v1002 = vunpack.c.l.b16 %v928
    %v1003 = vunpack.c.h.b16 %v928
    %v1004 = vunpack.c.l.b16 %v929
    %v1005 = vunpack.c.h.b16 %v929
    %v1006 = vunpack.c.l.b16 %v930
    %v1007 = vunpack.c.h.b16 %v930
    %v1008 = vunpack.c.l.b16 %v931
    %v1009 = vunpack.c.h.b16 %v931
    %v1010 = vunpack.c.l.b16 %v932
    %v1011 = vunpack.c.h.b16 %v932
    %v1012 = vunpack.c.l.b16 %v933
    %v1013 = vunpack.c.h.b16 %v933
    %v1014 = vunpack.c.l.b16 %v934
    %v1015 = vunpack.c.h.b16 %v934
    %v1016 = vunpack.c.l.b16 %v935
    %v1017 = vunpack.c.h.b16 %v935
    %v1018 = vunpack.c.l.b16 %v936
    %v1019 = vunpack.c.h.b16 %v936
    %v1020 = vunpack.c.l.b16 %v937
    %v1021 = vunpack.c.h.b16 %v937
    %v1022 = vunpack.c.l.b16 %v938
    %v1023 = vunpack.c.h.b16 %v938
    %v1024 = vunpack.c.l.b16 %v939
    %v1025 = vunpack.c.h.b16 %v939
    %v1026 = vunpack.c.l.b16 %v940
    %v1027 = vunpack.c.h.b16 %v940
    %v1028 = vunpack.c.l.b16 %v941
    %v1029 = vunpack.c.h.b16 %v941
    %v1030 = vunpack.c.l.b16 %v942
    %v1031 = vunpack.c.h.b16 %v942
    %v1032 = vunpack.c.l.b16 %v943
    %v1033 = vunpack.c.h.b16 %v943
    %v1034 = vunpack.c.l.b16 %v944
    %v1035 = vunpack.c.h.b16 %v944
    %v1036 = vunpack.c.l.b16 %v945
    %v1037 = vunpack.c.h.b16 %v945
    %v1038 = vunpack.c.l.b16 %v946
    %v1039 = vunpack.c.h.b16 %v946
    %v1040 = vunpack.c.l.b16 %v947
    %v1041 = vunpack.c.h.b16 %v947
    %v1042 = vunpack.c.l.b16 %v948
    %v1043 = vunpack.c.h.b16 %v948
    %v1044 = vunpack.c.l.b16 %v949
    %v1045 = vunpack.c.h.b16 %v949
    %v1046 = vunpack.c.l.b16 %v950
    %v1047 = vunpack.c.h.b16 %v950
    %v1048 = vunpack.c.l.b16 %v951
    %v1049 = vunpack.c.h.b16 %v951
    %v1050 = vunpack.c.l.b16 %v952
    %v1051 = vunpack.c.h.b16 %v952
    %v1052 = vunpack.c.l.b16 %v953
    %v1053 = vunpack.c.h.b16 %v953
    %v1054 = vunpack.c.l.b16 %v954
    %v1055 = vunpack.c.h.b16 %v954
    %v1056 = vunpack.c.l.b16 %v955
    %v1057 = vunpack.c.h.b16 %v955
    %v1058 = vunpack.c.l.b16 %v956
    %v1059 = vunpack.c.h.b16 %v956
    %v1060 = vunpack.c.l.b16 %v957
    %v1061 = vunpack.c.h.b16 %v957
    %v1062 = vunpack.c.l.b16 %v958
    %v1063 = vunpack.c.h.b16 %v958
    %v1064 = vpack.c.b16 %v1002, %v1000
    %v1065 = vpack.c.b16 %v1003, %v1001
    %v1066 = vpack.c.b16 %v1006, %v1004
    %v1067 = vpack.c.b16 %v1007, %v1005
    %v1068 = vpack.c.b16 %v1010, %v1008
    %v1069 = vpack.c.b16 %v1011, %v1009
    %v1070 = vpack.c.b16 %v1014, %v1012
    %v1071 = vpack.c.b16 %v1015, %v1013
    %v1072 = vpack.c.b16 %v1018, %v1016
    %v1073 = vpack.c.b16 %v1019, %v1017
    %v1074 = vpack.c.b16 %v1022, %v1020
    %v1075 = vpack.c.b16 %v1023, %v1021
    %v1076 = vpack.c.b16 %v1026, %v1024
    %v1077 = vpack.c.b16 %v1027, %v1025
    %v1078 = vpack.c.b16 %v1030, %v1028
    %v1079 = vpack.c.b16 %v1031, %v1029
    %v1080 = vpack.c.b16 %v1034, %v1032
    %v1081 = vpack.c.b16 %v1035, %v1033
    %v1082 = vpack.c.b16 %v1038, %v1036
    %v1083 = vpack.c.b16 %v1039, %v1037
    %v1084 = vpack.c.b16 %v1042, %v1040
    %v1085 = vpack.c.b16 %v1043, %v1041
    %v1086 = vpack.c.b16 %v1046, %v1044
    %v1087 = vpack.c.b16 %v1047, %v1045
    %v1088 = vpack.c.b16 %v1050, %v1048
    %v1089 = vpack.c.b16 %v1051, %v1049
    %v1090 = vpack.c.b16 %v1054, %v1052
    %v1091 = vpack.c.b16 %v1055, %v1053
    %v1092 = vpack.c.b16 %v1058, %v1056
    %v1093 = vpack.c.b16 %v1059, %v1057
    %v1094 = vpack.c.b16 %v1062, %v1060
    %v1095 = vpack.c.b16 %v1063, %v1061
    %1128 = vmatpush.bf16.msra.mxu0 %v1078
    %1129 = vmatpush.bf16.msra.mxu0 %v1076
    %1130 = vmatpush.bf16.msra.mxu0 %v1074
    %1131 = vmatpush.bf16.msra.mxu0 %v1072
    %1132 = vmatpush.bf16.msra.mxu0 %v1070
    %1133 = vmatpush.bf16.msra.mxu0 %v1068
    %1134 = vmatpush.bf16.msra.mxu0 %v1066
    %1135 = vmatpush.bf16.msra.mxu0 %v1064
    %1136 = vmatmul.bf16.gmra.mxu0 %v895
    %v1137 = vpop.f32.mrf.mxu0
    %v1138 = vadd.f32 %v966, %v1137
    %v1139 = vpop.f32.mrf.mxu0
    %v1140 = vadd.f32 %v966, %v1139
    %1141 = vmatmul.bf16.gmra.mxu0 %v897
    %v1142 = vpop.f32.mrf.mxu0
    %v1143 = vadd.f32 %v966, %v1142
    %v1144 = vpop.f32.mrf.mxu0
    %v1145 = vadd.f32 %v966, %v1144
    %1146 = vmatmul.bf16.gmra.mxu0 %v899
    %v1147 = vpop.f32.mrf.mxu0
    %v1148 = vadd.f32 %v966, %v1147
    %v1149 = vpop.f32.mrf.mxu0
    %v1150 = vadd.f32 %v966, %v1149
    %1151 = vmatmul.bf16.gmra.mxu0 %v901
    %v1152 = vpop.f32.mrf.mxu0
    %v1153 = vadd.f32 %v966, %v1152
    %v1154 = vpop.f32.mrf.mxu0
    %v1155 = vadd.f32 %v966, %v1154
    %1156 = vmatmul.bf16.gmra.mxu0 %v903
    %v1157 = vpop.f32.mrf.mxu0
    %v1158 = vadd.f32 %v966, %v1157
    %v1159 = vpop.f32.mrf.mxu0
    %v1160 = vadd.f32 %v966, %v1159
    %1161 = vmatmul.bf16.gmra.mxu0 %v905
    %v1162 = vpop.f32.mrf.mxu0
    %v1163 = vadd.f32 %v966, %v1162
    %v1164 = vpop.f32.mrf.mxu0
    %v1165 = vadd.f32 %v966, %v1164
    %1166 = vmatmul.bf16.gmra.mxu0 %v907
    %v1167 = vpop.f32.mrf.mxu0
    %v1168 = vadd.f32 %v966, %v1167
    %v1169 = vpop.f32.mrf.mxu0
    %v1170 = vadd.f32 %v966, %v1169
    %1171 = vmatmul.bf16.gmra.mxu0 %v909
    %v1172 = vpop.f32.mrf.mxu0
    %v1173 = vadd.f32 %v966, %v1172
    %v1174 = vpop.f32.mrf.mxu0
    %v1175 = vadd.f32 %v966, %v1174
    %1176 = vmatmul.bf16.gmra.mxu0 %v911
    %v1177 = vpop.f32.mrf.mxu0
    %v1178 = vadd.f32 %v966, %v1177
    %v1179 = vpop.f32.mrf.mxu0
    %v1180 = vadd.f32 %v966, %v1179
    %1181 = vmatmul.bf16.gmra.mxu0 %v913
    %v1182 = vpop.f32.mrf.mxu0
    %v1183 = vadd.f32 %v966, %v1182
    %v1184 = vpop.f32.mrf.mxu0
    %v1185 = vadd.f32 %v966, %v1184
    %1186 = vmatmul.bf16.gmra.mxu0 %v915
    %v1187 = vpop.f32.mrf.mxu0
    %v1188 = vadd.f32 %v966, %v1187
    %v1189 = vpop.f32.mrf.mxu0
    %v1190 = vadd.f32 %v966, %v1189
    %1191 = vmatmul.bf16.gmra.mxu0 %v917
    %v1192 = vpop.f32.mrf.mxu0
    %v1193 = vadd.f32 %v966, %v1192
    %v1194 = vpop.f32.mrf.mxu0
    %v1195 = vadd.f32 %v966, %v1194
    %1196 = vmatmul.bf16.gmra.mxu0 %v919
    %v1197 = vpop.f32.mrf.mxu0
    %v1198 = vadd.f32 %v966, %v1197
    %v1199 = vpop.f32.mrf.mxu0
    %v1200 = vadd.f32 %v966, %v1199
    %1201 = vmatmul.bf16.gmra.mxu0 %v921
    %v1202 = vpop.f32.mrf.mxu0
    %v1203 = vadd.f32 %v966, %v1202
    %v1204 = vpop.f32.mrf.mxu0
    %v1205 = vadd.f32 %v966, %v1204
    %1206 = vmatmul.bf16.gmra.mxu0 %v923
    %v1207 = vpop.f32.mrf.mxu0
    %v1208 = vadd.f32 %v966, %v1207
    %v1209 = vpop.f32.mrf.mxu0
    %v1210 = vadd.f32 %v966, %v1209
    %1211 = vmatmul.bf16.gmra.mxu0 %v925
    %v1212 = vpop.f32.mrf.mxu0
    %v1213 = vadd.f32 %v966, %v1212
    %v1214 = vpop.f32.mrf.mxu0
    %v1215 = vadd.f32 %v966, %v1214
    %1216 = vdwg.mxu0
    %1217 = vmatpush.bf16.msra.mxu0 %v1094
    %1218 = vmatpush.bf16.msra.mxu0 %v1092
    %1219 = vmatpush.bf16.msra.mxu0 %v1090
    %1220 = vmatpush.bf16.msra.mxu0 %v1088
    %1221 = vmatpush.bf16.msra.mxu0 %v1086
    %1222 = vmatpush.bf16.msra.mxu0 %v1084
    %1223 = vmatpush.bf16.msra.mxu0 %v1082
    %1224 = vmatpush.bf16.msra.mxu0 %v1080
    %1225 = vmatmul.bf16.gmra.mxu0 %v896
    %v1226 = vpop.f32.mrf.mxu0
    %v1227 = vadd.f32 %v1138, %v1226
    %v1228 = vpop.f32.mrf.mxu0
    %v1229 = vadd.f32 %v1140, %v1228
    %1230 = vmatmul.bf16.gmra.mxu0 %v898
    %v1231 = vpop.f32.mrf.mxu0
    %v1232 = vadd.f32 %v1143, %v1231
    %v1233 = vpop.f32.mrf.mxu0
    %v1234 = vadd.f32 %v1145, %v1233
    %1235 = vmatmul.bf16.gmra.mxu0 %v900
    %v1236 = vpop.f32.mrf.mxu0
    %v1237 = vadd.f32 %v1148, %v1236
    %v1238 = vpop.f32.mrf.mxu0
    %v1239 = vadd.f32 %v1150, %v1238
    %1240 = vmatmul.bf16.gmra.mxu0 %v902
    %v1241 = vpop.f32.mrf.mxu0
    %v1242 = vadd.f32 %v1153, %v1241
    %v1243 = vpop.f32.mrf.mxu0
    %v1244 = vadd.f32 %v1155, %v1243
    %1245 = vmatmul.bf16.gmra.mxu0 %v904
    %v1246 = vpop.f32.mrf.mxu0
    %v1247 = vadd.f32 %v1158, %v1246
    %v1248 = vpop.f32.mrf.mxu0
    %v1249 = vadd.f32 %v1160, %v1248
    %1250 = vmatmul.bf16.gmra.mxu0 %v906
    %v1251 = vpop.f32.mrf.mxu0
    %v1252 = vadd.f32 %v1163, %v1251
    %v1253 = vpop.f32.mrf.mxu0
    %v1254 = vadd.f32 %v1165, %v1253
    %1255 = vmatmul.bf16.gmra.mxu0 %v908
    %v1256 = vpop.f32.mrf.mxu0
    %v1257 = vadd.f32 %v1168, %v1256
    %v1258 = vpop.f32.mrf.mxu0
    %v1259 = vadd.f32 %v1170, %v1258
    %1260 = vmatmul.bf16.gmra.mxu0 %v910
    %v1261 = vpop.f32.mrf.mxu0
    %v1262 = vadd.f32 %v1173, %v1261
    %v1263 = vpop.f32.mrf.mxu0
    %v1264 = vadd.f32 %v1175, %v1263
    %1265 = vmatmul.bf16.gmra.mxu0 %v912
    %v1266 = vpop.f32.mrf.mxu0
    %v1267 = vadd.f32 %v1178, %v1266
    %v1268 = vpop.f32.mrf.mxu0
    %v1269 = vadd.f32 %v1180, %v1268
    %1270 = vmatmul.bf16.gmra.mxu0 %v914
    %v1271 = vpop.f32.mrf.mxu0
    %v1272 = vadd.f32 %v1183, %v1271
    %v1273 = vpop.f32.mrf.mxu0
    %v1274 = vadd.f32 %v1185, %v1273
    %1275 = vmatmul.bf16.gmra.mxu0 %v916
    %v1276 = vpop.f32.mrf.mxu0
    %v1277 = vadd.f32 %v1188, %v1276
    %v1278 = vpop.f32.mrf.mxu0
    %v1279 = vadd.f32 %v1190, %v1278
    %1280 = vmatmul.bf16.gmra.mxu0 %v918
    %v1281 = vpop.f32.mrf.mxu0
    %v1282 = vadd.f32 %v1193, %v1281
    %v1283 = vpop.f32.mrf.mxu0
    %v1284 = vadd.f32 %v1195, %v1283
    %1285 = vmatmul.bf16.gmra.mxu0 %v920
    %v1286 = vpop.f32.mrf.mxu0
    %v1287 = vadd.f32 %v1198, %v1286
    %v1288 = vpop.f32.mrf.mxu0
    %v1289 = vadd.f32 %v1200, %v1288
    %1290 = vmatmul.bf16.gmra.mxu0 %v922
    %v1291 = vpop.f32.mrf.mxu0
    %v1292 = vadd.f32 %v1203, %v1291
    %v1293 = vpop.f32.mrf.mxu0
    %v1294 = vadd.f32 %v1205, %v1293
    %1295 = vmatmul.bf16.gmra.mxu0 %v924
    %v1296 = vpop.f32.mrf.mxu0
    %v1297 = vadd.f32 %v1208, %v1296
    %v1298 = vpop.f32.mrf.mxu0
    %v1299 = vadd.f32 %v1210, %v1298
    %1300 = vmatmul.bf16.gmra.mxu0 %v926
    %v1301 = vpop.f32.mrf.mxu0
    %v1302 = vadd.f32 %v1213, %v1301
    %v1303 = vpop.f32.mrf.mxu0
    %v1304 = vadd.f32 %v1215, %v1303
    %1305 = vdwg.mxu0
    %1306 = vmatpush.bf16.msra.mxu0 %v1079
    %1307 = vmatpush.bf16.msra.mxu0 %v1077
    %1308 = vmatpush.bf16.msra.mxu0 %v1075
    %1309 = vmatpush.bf16.msra.mxu0 %v1073
    %1310 = vmatpush.bf16.msra.mxu0 %v1071
    %1311 = vmatpush.bf16.msra.mxu0 %v1069
    %1312 = vmatpush.bf16.msra.mxu0 %v1067
    %1313 = vmatpush.bf16.msra.mxu0 %v1065
    %1314 = vmatmul.bf16.gmra.mxu0 %v895
    %v1315 = vpop.f32.mrf.mxu0
    %v1316 = vadd.f32 %v967, %v1315
    %v1317 = vpop.f32.mrf.mxu0
    %v1318 = vadd.f32 %v967, %v1317
    %1319 = vmatmul.bf16.gmra.mxu0 %v897
    %v1320 = vpop.f32.mrf.mxu0
    %v1321 = vadd.f32 %v967, %v1320
    %v1322 = vpop.f32.mrf.mxu0
    %v1323 = vadd.f32 %v967, %v1322
    %1324 = vmatmul.bf16.gmra.mxu0 %v899
    %v1325 = vpop.f32.mrf.mxu0
    %v1326 = vadd.f32 %v967, %v1325
    %v1327 = vpop.f32.mrf.mxu0
    %v1328 = vadd.f32 %v967, %v1327
    %1329 = vmatmul.bf16.gmra.mxu0 %v901
    %v1330 = vpop.f32.mrf.mxu0
    %v1331 = vadd.f32 %v967, %v1330
    %v1332 = vpop.f32.mrf.mxu0
    %v1333 = vadd.f32 %v967, %v1332
    %1334 = vmatmul.bf16.gmra.mxu0 %v903
    %v1335 = vpop.f32.mrf.mxu0
    %v1336 = vadd.f32 %v967, %v1335
    %v1337 = vpop.f32.mrf.mxu0
    %v1338 = vadd.f32 %v967, %v1337
    %1339 = vmatmul.bf16.gmra.mxu0 %v905
    %v1340 = vpop.f32.mrf.mxu0
    %v1341 = vadd.f32 %v967, %v1340
    %v1342 = vpop.f32.mrf.mxu0
    %v1343 = vadd.f32 %v967, %v1342
    %1344 = vmatmul.bf16.gmra.mxu0 %v907
    %v1345 = vpop.f32.mrf.mxu0
    %v1346 = vadd.f32 %v967, %v1345
    %v1347 = vpop.f32.mrf.mxu0
    %v1348 = vadd.f32 %v967, %v1347
    %1349 = vmatmul.bf16.gmra.mxu0 %v909
    %v1350 = vpop.f32.mrf.mxu0
    %v1351 = vadd.f32 %v967, %v1350
    %v1352 = vpop.f32.mrf.mxu0
    %v1353 = vadd.f32 %v967, %v1352
    %1354 = vmatmul.bf16.gmra.mxu0 %v911
    %v1355 = vpop.f32.mrf.mxu0
    %v1356 = vadd.f32 %v967, %v1355
    %v1357 = vpop.f32.mrf.mxu0
    %v1358 = vadd.f32 %v967, %v1357
    %1359 = vmatmul.bf16.gmra.mxu0 %v913
    %v1360 = vpop.f32.mrf.mxu0
    %v1361 = vadd.f32 %v967, %v1360
    %v1362 = vpop.f32.mrf.mxu0
    %v1363 = vadd.f32 %v967, %v1362
    %1364 = vmatmul.bf16.gmra.mxu0 %v915
    %v1365 = vpop.f32.mrf.mxu0
    %v1366 = vadd.f32 %v967, %v1365
    %v1367 = vpop.f32.mrf.mxu0
    %v1368 = vadd.f32 %v967, %v1367
    %1369 = vmatmul.bf16.gmra.mxu0 %v917
    %v1370 = vpop.f32.mrf.mxu0
    %v1371 = vadd.f32 %v967, %v1370
    %v1372 = vpop.f32.mrf.mxu0
    %v1373 = vadd.f32 %v967, %v1372
    %1374 = vmatmul.bf16.gmra.mxu0 %v919
    %v1375 = vpop.f32.mrf.mxu0
    %v1376 = vadd.f32 %v967, %v1375
    %v1377 = vpop.f32.mrf.mxu0
    %v1378 = vadd.f32 %v967, %v1377
    %1379 = vmatmul.bf16.gmra.mxu0 %v921
    %v1380 = vpop.f32.mrf.mxu0
    %v1381 = vadd.f32 %v967, %v1380
    %v1382 = vpop.f32.mrf.mxu0
    %v1383 = vadd.f32 %v967, %v1382
    %1384 = vmatmul.bf16.gmra.mxu0 %v923
    %v1385 = vpop.f32.mrf.mxu0
    %v1386 = vadd.f32 %v967, %v1385
    %v1387 = vpop.f32.mrf.mxu0
    %v1388 = vadd.f32 %v967, %v1387
    %1389 = vmatmul.bf16.gmra.mxu0 %v925
    %v1390 = vpop.f32.mrf.mxu0
    %v1391 = vadd.f32 %v967, %v1390
    %v1392 = vpop.f32.mrf.mxu0
    %v1393 = vadd.f32 %v967, %v1392
    %1394 = vdwg.mxu0
    %1395 = vmatpush.bf16.msra.mxu0 %v1095
    %1396 = vmatpush.bf16.msra.mxu0 %v1093
    %1397 = vmatpush.bf16.msra.mxu0 %v1091
    %1398 = vmatpush.bf16.msra.mxu0 %v1089
    %1399 = vmatpush.bf16.msra.mxu0 %v1087
    %1400 = vmatpush.bf16.msra.mxu0 %v1085
    %1401 = vmatpush.bf16.msra.mxu0 %v1083
    %1402 = vmatpush.bf16.msra.mxu0 %v1081
    %1403 = vmatmul.bf16.gmra.mxu0 %v896
    %v1404 = vpop.f32.mrf.mxu0
    %v1405 = vadd.f32 %v1316, %v1404
    %v1406 = vpop.f32.mrf.mxu0
    %v1407 = vadd.f32 %v1318, %v1406
    %1408 = vmatmul.bf16.gmra.mxu0 %v898
    %v1409 = vpop.f32.mrf.mxu0
    %v1410 = vadd.f32 %v1321, %v1409
    %v1411 = vpop.f32.mrf.mxu0
    %v1412 = vadd.f32 %v1323, %v1411
    %1413 = vmatmul.bf16.gmra.mxu0 %v900
    %v1414 = vpop.f32.mrf.mxu0
    %v1415 = vadd.f32 %v1326, %v1414
    %v1416 = vpop.f32.mrf.mxu0
    %v1417 = vadd.f32 %v1328, %v1416
    %1418 = vmatmul.bf16.gmra.mxu0 %v902
    %v1419 = vpop.f32.mrf.mxu0
    %v1420 = vadd.f32 %v1331, %v1419
    %v1421 = vpop.f32.mrf.mxu0
    %v1422 = vadd.f32 %v1333, %v1421
    %1423 = vmatmul.bf16.gmra.mxu0 %v904
    %v1424 = vpop.f32.mrf.mxu0
    %v1425 = vadd.f32 %v1336, %v1424
    %v1426 = vpop.f32.mrf.mxu0
    %v1427 = vadd.f32 %v1338, %v1426
    %1428 = vmatmul.bf16.gmra.mxu0 %v906
    %v1429 = vpop.f32.mrf.mxu0
    %v1430 = vadd.f32 %v1341, %v1429
    %v1431 = vpop.f32.mrf.mxu0
    %v1432 = vadd.f32 %v1343, %v1431
    %1433 = vmatmul.bf16.gmra.mxu0 %v908
    %v1434 = vpop.f32.mrf.mxu0
    %v1435 = vadd.f32 %v1346, %v1434
    %v1436 = vpop.f32.mrf.mxu0
    %v1437 = vadd.f32 %v1348, %v1436
    %1438 = vmatmul.bf16.gmra.mxu0 %v910
    %v1439 = vpop.f32.mrf.mxu0
    %v1440 = vadd.f32 %v1351, %v1439
    %v1441 = vpop.f32.mrf.mxu0
    %v1442 = vadd.f32 %v1353, %v1441
    %1443 = vmatmul.bf16.gmra.mxu0 %v912
    %v1444 = vpop.f32.mrf.mxu0
    %v1445 = vadd.f32 %v1356, %v1444
    %v1446 = vpop.f32.mrf.mxu0
    %v1447 = vadd.f32 %v1358, %v1446
    %1448 = vmatmul.bf16.gmra.mxu0 %v914
    %v1449 = vpop.f32.mrf.mxu0
    %v1450 = vadd.f32 %v1361, %v1449
    %v1451 = vpop.f32.mrf.mxu0
    %v1452 = vadd.f32 %v1363, %v1451
    %1453 = vmatmul.bf16.gmra.mxu0 %v916
    %v1454 = vpop.f32.mrf.mxu0
    %v1455 = vadd.f32 %v1366, %v1454
    %v1456 = vpop.f32.mrf.mxu0
    %v1457 = vadd.f32 %v1368, %v1456
    %1458 = vmatmul.bf16.gmra.mxu0 %v918
    %v1459 = vpop.f32.mrf.mxu0
    %v1460 = vadd.f32 %v1371, %v1459
    %v1461 = vpop.f32.mrf.mxu0
    %v1462 = vadd.f32 %v1373, %v1461
    %1463 = vmatmul.bf16.gmra.mxu0 %v920
    %v1464 = vpop.f32.mrf.mxu0
    %v1465 = vadd.f32 %v1376, %v1464
    %v1466 = vpop.f32.mrf.mxu0
    %v1467 = vadd.f32 %v1378, %v1466
    %1468 = vmatmul.bf16.gmra.mxu0 %v922
    %v1469 = vpop.f32.mrf.mxu0
    %v1470 = vadd.f32 %v1381, %v1469
    %v1471 = vpop.f32.mrf.mxu0
    %v1472 = vadd.f32 %v1383, %v1471
    %1473 = vmatmul.bf16.gmra.mxu0 %v924
    %v1474 = vpop.f32.mrf.mxu0
    %v1475 = vadd.f32 %v1386, %v1474
    %v1476 = vpop.f32.mrf.mxu0
    %v1477 = vadd.f32 %v1388, %v1476
    %1478 = vmatmul.bf16.gmra.mxu0 %v926
    %v1479 = vpop.f32.mrf.mxu0
    %v1480 = vadd.f32 %v1391, %v1479
    %v1481 = vpop.f32.mrf.mxu0
    %v1482 = vadd.f32 %v1393, %v1481
    %1483 = vdwg.mxu0
    %v1484 = vpack.c.bf16 %v1405, %v1227
    %v1485 = vpack.c.bf16 %v1407, %v1229
    %v1486 = vpack.c.bf16 %v1410, %v1232
    %v1487 = vpack.c.bf16 %v1412, %v1234
    %v1488 = vpack.c.bf16 %v1415, %v1237
    %v1489 = vpack.c.bf16 %v1417, %v1239
    %v1490 = vpack.c.bf16 %v1420, %v1242
    %v1491 = vpack.c.bf16 %v1422, %v1244
    %v1492 = vpack.c.bf16 %v1425, %v1247
    %v1493 = vpack.c.bf16 %v1427, %v1249
    %v1494 = vpack.c.bf16 %v1430, %v1252
    %v1495 = vpack.c.bf16 %v1432, %v1254
    %v1496 = vpack.c.bf16 %v1435, %v1257
    %v1497 = vpack.c.bf16 %v1437, %v1259
    %v1498 = vpack.c.bf16 %v1440, %v1262
    %v1499 = vpack.c.bf16 %v1442, %v1264
    %v1500 = vpack.c.bf16 %v1445, %v1267
    %v1501 = vpack.c.bf16 %v1447, %v1269
    %v1502 = vpack.c.bf16 %v1450, %v1272
    %v1503 = vpack.c.bf16 %v1452, %v1274
    %v1504 = vpack.c.bf16 %v1455, %v1277
    %v1505 = vpack.c.bf16 %v1457, %v1279
    %v1506 = vpack.c.bf16 %v1460, %v1282
    %v1507 = vpack.c.bf16 %v1462, %v1284
    %v1508 = vpack.c.bf16 %v1465, %v1287
    %v1509 = vpack.c.bf16 %v1467, %v1289
    %v1510 = vpack.c.bf16 %v1470, %v1292
    %v1511 = vpack.c.bf16 %v1472, %v1294
    %v1512 = vpack.c.bf16 %v1475, %v1297
    %v1513 = vpack.c.bf16 %v1477, %v1299
    %v1514 = vpack.c.bf16 %v1480, %v1302
    %v1515 = vpack.c.bf16 %v1482, %v1304
    %1516 = vst [vmem:[#allocation10] sm:$0xff] %v1484
    %1517 = vst [vmem:[#allocation10 + $0x8] sm:$0xff] %v1485
    %1518 = vst [vmem:[#allocation10 + $0x10] sm:$0xff] %v1486
    %1519 = vst [vmem:[#allocation10 + $0x18] sm:$0xff] %v1487
    %1520 = vst [vmem:[#allocation10 + $0x20] sm:$0xff] %v1488
    %1521 = vst [vmem:[#allocation10 + $0x28] sm:$0xff] %v1489
    %1522 = vst [vmem:[#allocation10 + $0x30] sm:$0xff] %v1490
    %1523 = vst [vmem:[#allocation10 + $0x38] sm:$0xff] %v1491
    %1524 = vst [vmem:[#allocation10 + $0x40] sm:$0xff] %v1492
    %1525 = vst [vmem:[#allocation10 + $0x48] sm:$0xff] %v1493
    %1526 = vst [vmem:[#allocation10 + $0x50] sm:$0xff] %v1494
    %1527 = vst [vmem:[#allocation10 + $0x58] sm:$0xff] %v1495
    %1528 = vst [vmem:[#allocation10 + $0x60] sm:$0xff] %v1496
    %1529 = vst [vmem:[#allocation10 + $0x68] sm:$0xff] %v1497
    %1530 = vst [vmem:[#allocation10 + $0x70] sm:$0xff] %v1498
    %1531 = vst [vmem:[#allocation10 + $0x78] sm:$0xff] %v1499
    %1532 = vst [vmem:[#allocation10 + $0x80] sm:$0xff] %v1500
    %1533 = vst [vmem:[#allocation10 + $0x88] sm:$0xff] %v1501
    %1534 = vst [vmem:[#allocation10 + $0x90] sm:$0xff] %v1502
    %1535 = vst [vmem:[#allocation10 + $0x98] sm:$0xff] %v1503
    %1536 = vst [vmem:[#allocation10 + $0xa0] sm:$0xff] %v1504
    %1537 = vst [vmem:[#allocation10 + $0xa8] sm:$0xff] %v1505
    %1538 = vst [vmem:[#allocation10 + $0xb0] sm:$0xff] %v1506
    %1539 = vst [vmem:[#allocation10 + $0xb8] sm:$0xff] %v1507
    %1540 = vst [vmem:[#allocation10 + $0xc0] sm:$0xff] %v1508
    %1541 = vst [vmem:[#allocation10 + $0xc8] sm:$0xff] %v1509
    %1542 = vst [vmem:[#allocation10 + $0xd0] sm:$0xff] %v1510
    %1543 = vst [vmem:[#allocation10 + $0xd8] sm:$0xff] %v1511
    %1544 = vst [vmem:[#allocation10 + $0xe0] sm:$0xff] %v1512
    %1545 = vst [vmem:[#allocation10 + $0xe8] sm:$0xff] %v1513
    %1546 = vst [vmem:[#allocation10 + $0xf0] sm:$0xff] %v1514
    %1547 = vst [vmem:[#allocation10 + $0xf8] sm:$0xff] %v1515
    // Predicated region
    $region38: #{tpu_custom_call.1} parent=1 // pred_check
      _
    $region39: #{tpu_custom_call.1} parent=1 // pred_check_branch
      %1549 = sbr.rel (0) target = $region41
    $region40: #{tpu_custom_call.1} parent=1 // pred_region
      %1551 = vsyncadd [#allocation4], 0
      %s1552 = sshll.u32 [#allocation10], 4
      %s1553 = int_to_ptr.vmem [resolvable:$true] %s1552
      %s1554 = sshll.u32 %s5, 4
      %s1555 = int_to_ptr.hbm [resolvable:$true] %s1554
      %1560 = dma.vmem_to_hbm [thread:$0]  %s1553, 4096, %s1555, [#allocation4], 128, 128, 8
    $region41: #{tpu_custom_call.1} parent=1 // pred_fallthru
      _
    // Predicated region
    $region42: #{tpu_custom_call.1} parent=1 // pred_check
      _
    $region43: #{tpu_custom_call.1} parent=1 // pred_check_branch
      %1562 = sbr.rel (0) target = $region45
    $region44: #{tpu_custom_call.1} parent=1 // pred_region
      %1564 = dma.done [#allocation4], 4096
    $region45: #{tpu_custom_call.1} parent=1 // pred_fallthru
      _
    %1565 = vsyncpa [#allocation3], 1
    %1566 = vsyncpa [#allocation6], 1
    %1567 = vsyncpa [#allocation9], 1
    %1568 = vsyncpa [#allocation4], 1

</llo_original>
